<compile_context>
chip_gen: v7x
topology: tpu7x:2x2x1
jax: 0.10.0
libtpu: 0.0.40
codegen_flags: <defaults>
</compile_context>

<pallas_src>
import jax
import jax.numpy as jnp
import numpy as np
from jax.experimental import pallas as pl
from jax.experimental.pallas import tpu as pltpu

GROUPS = 4
HIDDEN = 128


# --------------------------- Pallas kernel ----------------------------------

def _make_kernel(TB, Lo2s, Lo2e, H):

    def branch(re_ref, ro_ref, msk_ref, w1_ref, b1_ref, w2_ref, b2_ref,
               w3_ref, b3_ref, Lo2):
        # conv1 (k=3, stride=2, pad=1; groups packed block-diagonally into w1):
        # one bf16 dot per output-position parity, f32 accumulation.
        w1 = w1_ref[...]                                         # [3C, H] bf16
        b1 = b1_ref[...]                                         # [1, H]  f32
        h1e = jnp.maximum(
            jnp.dot(re_ref[...], w1, preferred_element_type=jnp.float32) + b1, 0.0)
        h1o = jnp.maximum(
            jnp.dot(ro_ref[...], w1, preferred_element_type=jnp.float32) + b1, 0.0)

        # conv2 taps at output position t: h1[2t-1] (tap0), h1[2t] (e1), h1[2t+1] (o1).
        # tap0 = o1 shifted down one row (XLU roll), zeroed at t == 0 of every
        # batch element via the precomputed first-position mask.
        tap0 = pltpu.roll(h1o, 1, 0) * msk_ref[...]
        t0 = tap0.astype(jnp.bfloat16)
        e1 = h1e.astype(jnp.bfloat16)
        o1 = h1o.astype(jnp.bfloat16)

        # conv2: three accumulated dots against static 128-row slices of the
        # packed [3H, H] weight (avoids the [N2, 3H] concatenated temp).
        h2 = jnp.dot(t0, w2_ref[0:H, :], preferred_element_type=jnp.float32)
        h2 = h2 + jnp.dot(e1, w2_ref[H:2 * H, :], preferred_element_type=jnp.float32)
        h2 = h2 + jnp.dot(o1, w2_ref[2 * H:3 * H, :], preferred_element_type=jnp.float32)
        h2 = jnp.maximum(h2 + b2_ref[...], 0.0)                  # [TB*Lo2, H] f32

        # final conv (kernel_size == Lo2): scale by w3, reduce time + channels.
        h2r = h2.reshape(TB, Lo2, H)                             # free (Lo2 % 8 == 0)
        w3 = w3_ref[...]                                         # [Lo2, H] f32
        z = jnp.sum(h2r * w3[None, :, :], axis=1)                # [TB, H]
        per_b = jnp.sum(z, axis=-1, keepdims=True)               # [TB, 1]
        return per_b + b3_ref[...]

    def kernel(se_ref, so_ref, ee_ref, eo_ref, ms_ref, me_ref,
               w1s_ref, b1s_ref, w2s_ref, b2s_ref, w3s_ref, b3s_ref,
               w1e_ref, b1e_ref, w2e_ref, b2e_ref, w3e_ref, b3e_ref,
               os_ref, oe_ref):
        os_ref[...] = branch(se_ref, so_ref, ms_ref, w1s_ref, b1s_ref,
                             w2s_ref, b2s_ref, w3s_ref, b3s_ref, Lo2s)
        oe_ref[...] = branch(ee_ref, eo_ref, me_ref, w1e_ref, b1e_ref,
                             w2e_ref, b2e_ref, w3e_ref, b3e_ref, Lo2e)

    return kernel


# --------------------------- weight packing (hoisted) ------------------------

def _grouped_conv_matrix(w, groups):
    """PyTorch grouped Conv1d weight [O, Cin/g, K] -> dense [K*Cin, O]
    (tap-major rows, block-diagonal across groups)."""
    w = np.asarray(w, np.float32)
    O, Cg, K = w.shape
    Cin = Cg * groups
    Og = O // groups
    Wd = np.zeros((K, Cin, O), np.float32)
    for g in range(groups):
        Wd[:, g * Cg:(g + 1) * Cg, g * Og:(g + 1) * Og] = \
            np.transpose(w[g * Og:(g + 1) * Og], (2, 1, 0))
    return Wd.reshape(K * Cin, O)


def pack_params(params, groups=GROUPS):
    """One-time packing of PyTorch-layout params into kernel layout.

    conv1/conv2 matmul weights are stored in bf16 (MXU-native operands, f32
    accumulation in-kernel); biases and the final w3 stay f32.
    """
    def grouped(w):
        return jnp.asarray(_grouped_conv_matrix(w, groups), jnp.bfloat16)

    def f32(x, shape):
        return jnp.asarray(x, jnp.float32).reshape(shape)

    return dict(
        w1s=grouped(params['w1s']), b1s=f32(params['b1s'], (1, -1)),
        w2s=grouped(params['w2s']), b2s=f32(params['b2s'], (1, -1)),
        w3s=jnp.asarray(np.transpose(np.asarray(params['w3s'], np.float32)[0], (1, 0))),
        b3s=f32(params['b3s'], (1, 1)),
        w1e=grouped(params['w1e']), b1e=f32(params['b1e'], (1, -1)),
        w2e=grouped(params['w2e']), b2e=f32(params['b2e'], (1, -1)),
        w3e=jnp.asarray(np.transpose(np.asarray(params['w3e'], np.float32)[0], (1, 0))),
        b3e=f32(params['b3e'], (1, 1)),
    )


def init_params(key, start_sample_num, end_sample_num, feat_dim,
                hidden=HIDDEN, groups=GROUPS):
    ks = jax.random.split(key, 12)

    def conv_w(k, o, cin_g, ksz):
        return (jax.random.normal(k, (o, cin_g, ksz), jnp.float32)
                / np.sqrt(cin_g * ksz))

    def conv_b(k, o):
        return jax.random.normal(k, (o,), jnp.float32) * 0.01

    return dict(
        w1s=conv_w(ks[0], hidden, feat_dim // groups, 3), b1s=conv_b(ks[1], hidden),
        w2s=conv_w(ks[2], hidden, hidden // groups, 3),   b2s=conv_b(ks[3], hidden),
        w3s=conv_w(ks[4], 1, hidden, start_sample_num // 4), b3s=conv_b(ks[5], 1),
        w1e=conv_w(ks[6], hidden, feat_dim // groups, 3), b1e=conv_b(ks[7], hidden),
        w2e=conv_w(ks[8], hidden, hidden // groups, 3),   b2e=conv_b(ks[9], hidden),
        w3e=conv_w(ks[10], 1, hidden, end_sample_num // 4), b3e=conv_b(ks[11], 1),
    )


# --------------------------- helpers -----------------------------------------

def _round_up(x, m):
    return ((x + m - 1) // m) * m


def _vmem_limit_bytes():
    phys = 64 << 20                     # conservative default (v7x per-TC VMEM)
    try:
        info = pltpu.get_tpu_info()
        for attr in ("vmem_capacity_bytes", "vmem_bytes", "vmem_size_bytes"):
            v = getattr(info, attr, None)
            if v:
                phys = int(v)
                break
    except Exception:
        pass
    return min(int(phys * 0.75), 96 << 20)


def _pick_batch_tile(B, Lo2s, Lo2e, C, H, vmem_limit):
    # Resident weights (bf16 matmul weights + small f32 constants).
    weight_bytes = 2 * (3 * C * H + 3 * H * H) * 2 + (Lo2s + Lo2e) * H * 4 + (64 << 10)
    # Per-batch-element cost: 4 bf16 activation inputs (double-buffered by the
    # pipeline) + rough f32 in-kernel temps (h1e/h1o/tap0/h2 per branch).
    per_b = (2 * 2 * (Lo2s + Lo2e) * 3 * C * 2) + ((Lo2s + Lo2e) * H * 4 * 6)
    budget = max(1 << 20, int(0.6 * vmem_limit) - weight_bytes)
    cap = max(1, budget // per_b)
    if cap >= B:
        if B >= 16:                     # >= 2 grid steps: keep both v7x TCs busy
            return _round_up((B + 1) // 2, 8)
        return B
    return max(8, min((cap // 8) * 8, _round_up((B + 1) // 2, 8)))


def _conv1_im2col_split(x_bcl):
    """[B, C, L] -> (rows_even, rows_odd), each [B*(L//4), 3*C] bf16.

    Row b*(L//4)+t holds the k=3 / stride=2 / pad=1 conv1 receptive field of
    output position t1 = 2*t (even) / 2*t+1 (odd), columns ordered tap-major.
    """
    B, C, L = x_bcl.shape
    Lo2 = L // 4
    x = jnp.transpose(x_bcl, (0, 2, 1)).astype(jnp.bfloat16)      # [B, L, C]
    xpad = jnp.pad(x, ((0, 0), (1, 1), (0, 0)))                   # [B, L+2, C]

    def gather(start):
        cols = [xpad[:, start + k: start + k + 4 * (Lo2 - 1) + 1: 4, :]
                for k in range(3)]
        return jnp.concatenate(cols, axis=-1).reshape(B * Lo2, 3 * C)

    return gather(0), gather(2)


# --------------------------- JAX glue (per-call, jitted) ---------------------

def start_end_regression(starts_feature, ends_feature, packed):
    """Pallas forward.  Inputs [B, C, L] (PyTorch NCW).  Returns [B, 2] f32."""
    B, C, Ls = starts_feature.shape
    Be, Ce, Le = ends_feature.shape
    assert B == Be and C == Ce
    assert Ls % 4 == 0 and Le % 4 == 0, "sample nums must be multiples of 4"
    H = packed['b1s'].shape[-1]

    # Pad L so L//4 is a multiple of 8: the [TB*Lo2, H] -> [TB, Lo2, H] reshape
    # is a free re-tiling and the activation blocks stay sublane-aligned.  The
    # extra conv2 positions are annihilated by zero-padded w3 rows below.
    Lsp, Lep = _round_up(Ls, 32), _round_up(Le, 32)
    Lo2s, Lo2e = Lsp // 4, Lep // 4

    vmem_limit = _vmem_limit_bytes()
    TB = _pick_batch_tile(B, Lo2s, Lo2e, C, H, vmem_limit)
    B_pad = _round_up(B, TB)

    sf = starts_feature.astype(jnp.float32)
    ef = ends_feature.astype(jnp.float32)
    if B_pad != B or Lsp != Ls:
        sf = jnp.pad(sf, ((0, B_pad - B), (0, 0), (0, Lsp - Ls)))
    if B_pad != B or Lep != Le:
        ef = jnp.pad(ef, ((0, B_pad - B), (0, 0), (0, Lep - Le)))

    se, so = _conv1_im2col_split(sf)          # each [B_pad*Lo2s, 3C] bf16
    ee, eo = _conv1_im2col_split(ef)          # each [B_pad*Lo2e, 3C] bf16

    # Zero-pad w3 over the padded conv2 positions (they then contribute 0).
    w3s, w3e = packed['w3s'], packed['w3e']
    if w3s.shape[0] != Lo2s:
        w3s = jnp.pad(w3s, ((0, Lo2s - w3s.shape[0]), (0, 0)))
    if w3e.shape[0] != Lo2e:
        w3e = jnp.pad(w3e, ((0, Lo2e - w3e.shape[0]), (0, 0)))

    # First-position masks (trace-time numpy constants, identical per grid step):
    # zero at t2 == 0 of each batch element so tap0 = roll(o1) is cut there.
    def first_pos_mask(lo2):
        m = (np.arange(TB * lo2) % lo2 != 0).astype(np.float32)
        return jnp.asarray(m.reshape(TB * lo2, 1))

    msk_s, msk_e = first_pos_mask(Lo2s), first_pos_mask(Lo2e)

    inputs = (se, so, ee, eo, msk_s, msk_e,
              packed['w1s'], packed['b1s'], packed['w2s'], packed['b2s'],
              w3s, packed['b3s'],
              packed['w1e'], packed['b1e'], packed['w2e'], packed['b2e'],
              w3e, packed['b3e'])

    def act_spec(lo2, cols):
        return pl.BlockSpec((TB * lo2, cols), lambda b: (b, 0))

    def const_spec(arr):
        return pl.BlockSpec(arr.shape, lambda b: (0, 0))

    in_specs = [act_spec(Lo2s, se.shape[1]), act_spec(Lo2s, so.shape[1]),
                act_spec(Lo2e, ee.shape[1]), act_spec(Lo2e, eo.shape[1])]
    in_specs += [const_spec(x) for x in inputs[4:]]

    out_s, out_e = pl.pallas_call(
        _make_kernel(TB, Lo2s, Lo2e, H),
        out_shape=(jax.ShapeDtypeStruct((B_pad, 1), jnp.float32),
                   jax.ShapeDtypeStruct((B_pad, 1), jnp.float32)),
        grid=(B_pad // TB,),
        in_specs=in_specs,
        out_specs=(pl.BlockSpec((TB, 1), lambda b: (b, 0)),
                   pl.BlockSpec((TB, 1), lambda b: (b, 0))),
        compiler_params=pltpu.CompilerParams(
            dimension_semantics=("parallel",),
            vmem_limit_bytes=vmem_limit),
    )(*inputs)

    out = jnp.concatenate([out_s, out_e], axis=1)
    return out[:B] if B_pad != B else out


# ----------------- pure-JAX reference (correctness check only) --------------

def _ref_conv1d(x, w, b, stride, padding, groups):
    out = jax.lax.conv_general_dilated(
        x, w, window_strides=(stride,), padding=[(padding, padding)],
        dimension_numbers=('NCH', 'OIH', 'NCH'), feature_group_count=groups,
        precision=jax.lax.Precision.HIGHEST)
    return out + b[None, :, None]


def reference(starts_feature, ends_feature, params, groups=GROUPS):
    def branch(x, w1, b1, w2, b2, w3, b3):
        h = jax.nn.relu(_ref_conv1d(x, w1, b1, 2, 1, groups))
        h = jax.nn.relu(_ref_conv1d(h, w2, b2, 2, 1, groups))
        return _ref_conv1d(h, w3, b3, 1, 0, 1)

    s = branch(starts_feature, params['w1s'], params['b1s'],
               params['w2s'], params['b2s'], params['w3s'], params['b3s'])
    e = branch(ends_feature, params['w1e'], params['b1e'],
               params['w2e'], params['b2e'], params['w3e'], params['b3e'])
    return jnp.concatenate([s, e], axis=1)[:, :, 0]            # cat + squeeze(2)


if __name__ == "__main__":
    B = 2
    feat_dim = 16
    start_sample_num = 32
    end_sample_num = 64

    key = jax.random.PRNGKey(0)
    kp, ksf, kef = jax.random.split(key, 3)
    params = init_params(kp, start_sample_num, end_sample_num, feat_dim)
    packed = pack_params(params)              # one-time, hoisted packing (bf16 weights)

    starts = jax.random.normal(ksf, (B, feat_dim, start_sample_num), jnp.float32)
    ends = jax.random.normal(kef, (B, feat_dim, end_sample_num), jnp.float32)

    fwd = jax.jit(start_end_regression)
    out = jax.block_until_ready(fwd(starts, ends, packed))

    ref = jax.block_until_ready(reference(starts, ends, params))
    assert out.shape == (B, 2), out.shape
    # bf16 MXU operands (f32 accumulation) vs the f32/HIGHEST reference.
    np.testing.assert_allclose(np.asarray(out), np.asarray(ref),
                               rtol=5e-2, atol=5e-2)
    print("KERNEL_OK")
</pallas_src>

<mosaic_0001>
module attributes {stable_mosaic.version = 11 : i64} {
  func.func @kernel(%arg0: i32, %arg1: memref<16x48xbf16, #tpu.memory_space<vmem>>, %arg2: memref<16x48xbf16, #tpu.memory_space<vmem>>, %arg3: memref<32x48xbf16, #tpu.memory_space<vmem>>, %arg4: memref<32x48xbf16, #tpu.memory_space<vmem>>, %arg5: memref<16x1xf32, #tpu.memory_space<vmem>>, %arg6: memref<32x1xf32, #tpu.memory_space<vmem>>, %arg7: memref<48x128xbf16, #tpu.memory_space<vmem>>, %arg8: memref<1x128xf32, #tpu.memory_space<vmem>>, %arg9: memref<384x128xbf16, #tpu.memory_space<vmem>>, %arg10: memref<1x128xf32, #tpu.memory_space<vmem>>, %arg11: memref<8x128xf32, #tpu.memory_space<vmem>>, %arg12: memref<1x1xf32, #tpu.memory_space<vmem>>, %arg13: memref<48x128xbf16, #tpu.memory_space<vmem>>, %arg14: memref<1x128xf32, #tpu.memory_space<vmem>>, %arg15: memref<384x128xbf16, #tpu.memory_space<vmem>>, %arg16: memref<1x128xf32, #tpu.memory_space<vmem>>, %arg17: memref<16x128xf32, #tpu.memory_space<vmem>>, %arg18: memref<1x1xf32, #tpu.memory_space<vmem>>, %arg19: memref<2x1xf32, #tpu.memory_space<vmem>>, %arg20: memref<2x1xf32, #tpu.memory_space<vmem>>) attributes {dimension_semantics = [#tpu.dimension_semantics<parallel>], iteration_bounds = array<i64: 1>, scalar_prefetch = 0 : i64, scratch_operands = 0 : i64, tpu.core_type = #tpu.core_type<tc>, window_params = [{transform_indices = @transform_0, window_bounds = array<i64: 16, 48>}, {transform_indices = @transform_1, window_bounds = array<i64: 16, 48>}, {transform_indices = @transform_2, window_bounds = array<i64: 32, 48>}, {transform_indices = @transform_3, window_bounds = array<i64: 32, 48>}, {pipeline_mode = #tpu.pipeline_mode<synchronous>, transform_indices = @transform_4, window_bounds = array<i64: 16, 1>}, {pipeline_mode = #tpu.pipeline_mode<synchronous>, transform_indices = @transform_5, window_bounds = array<i64: 32, 1>}, {pipeline_mode = #tpu.pipeline_mode<synchronous>, transform_indices = @transform_6, window_bounds = array<i64: 48, 128>}, {pipeline_mode = #tpu.pipeline_mode<synchronous>, transform_indices = @transform_7, window_bounds = array<i64: 1, 128>}, {pipeline_mode = #tpu.pipeline_mode<synchronous>, transform_indices = @transform_8, window_bounds = array<i64: 384, 128>}, {pipeline_mode = #tpu.pipeline_mode<synchronous>, transform_indices = @transform_9, window_bounds = array<i64: 1, 128>}, {pipeline_mode = #tpu.pipeline_mode<synchronous>, transform_indices = @transform_10, window_bounds = array<i64: 8, 128>}, {pipeline_mode = #tpu.pipeline_mode<synchronous>, transform_indices = @transform_11, window_bounds = array<i64: 1, 1>}, {pipeline_mode = #tpu.pipeline_mode<synchronous>, transform_indices = @transform_12, window_bounds = array<i64: 48, 128>}, {pipeline_mode = #tpu.pipeline_mode<synchronous>, transform_indices = @transform_13, window_bounds = array<i64: 1, 128>}, {pipeline_mode = #tpu.pipeline_mode<synchronous>, transform_indices = @transform_14, window_bounds = array<i64: 384, 128>}, {pipeline_mode = #tpu.pipeline_mode<synchronous>, transform_indices = @transform_15, window_bounds = array<i64: 1, 128>}, {pipeline_mode = #tpu.pipeline_mode<synchronous>, transform_indices = @transform_16, window_bounds = array<i64: 16, 128>}, {pipeline_mode = #tpu.pipeline_mode<synchronous>, transform_indices = @transform_17, window_bounds = array<i64: 1, 1>}, {transform_indices = @transform_18, window_bounds = array<i64: 2, 1>}, {transform_indices = @transform_19, window_bounds = array<i64: 2, 1>}]} {
    %c0 = arith.constant 0 : index
    %c0_0 = arith.constant 0 : index
    %0 = vector.load %arg7[%c0, %c0_0] : memref<48x128xbf16, #tpu.memory_space<vmem>>, vector<48x128xbf16>
    %c0_1 = arith.constant 0 : index
    %c0_2 = arith.constant 0 : index
    %1 = vector.load %arg8[%c0_1, %c0_2] : memref<1x128xf32, #tpu.memory_space<vmem>>, vector<1x128xf32>
    %c0_3 = arith.constant 0 : index
    %c0_4 = arith.constant 0 : index
    %2 = vector.load %arg1[%c0_3, %c0_4] : memref<16x48xbf16, #tpu.memory_space<vmem>>, vector<16x48xbf16>
    %cst = arith.constant dense<0.000000e+00> : vector<16x128xf32>
    %3 = tpu.matmul %2, %0, %cst {dimension_numbers = #tpu.dot_dimension_numbers<[1], [0], [0], [1], [0, 0, 1, 1], [], []>} : vector<16x48xbf16>, vector<48x128xbf16>, vector<16x128xf32> -> vector<16x128xf32>
    %4 = vector.broadcast %1 : vector<1x128xf32> to vector<16x128xf32>
    %5 = arith.addf %3, %4 : vector<16x128xf32>
    %cst_5 = arith.constant 0.000000e+00 : f32
    %6 = vector.broadcast %cst_5 : f32 to vector<16x128xf32>
    %7 = arith.maximumf %5, %6 : vector<16x128xf32>
    %c0_6 = arith.constant 0 : index
    %c0_7 = arith.constant 0 : index
    %8 = vector.load %arg2[%c0_6, %c0_7] : memref<16x48xbf16, #tpu.memory_space<vmem>>, vector<16x48xbf16>
    %cst_8 = arith.constant dense<0.000000e+00> : vector<16x128xf32>
    %9 = tpu.matmul %8, %0, %cst_8 {dimension_numbers = #tpu.dot_dimension_numbers<[1], [0], [0], [1], [0, 0, 1, 1], [], []>} : vector<16x48xbf16>, vector<48x128xbf16>, vector<16x128xf32> -> vector<16x128xf32>
    %10 = vector.broadcast %1 : vector<1x128xf32> to vector<16x128xf32>
    %11 = arith.addf %9, %10 : vector<16x128xf32>
    %cst_9 = arith.constant 0.000000e+00 : f32
    %12 = vector.broadcast %cst_9 : f32 to vector<16x128xf32>
    %13 = arith.maximumf %11, %12 : vector<16x128xf32>
    %c1_i32 = arith.constant 1 : i32
    %14 = tpu.dynamic_rotate %13 by %c1_i32 dim 0 : vector<16x128xf32>, i32 -> vector<16x128xf32>
    %c0_10 = arith.constant 0 : index
    %c0_11 = arith.constant 0 : index
    %15 = vector.load %arg5[%c0_10, %c0_11] : memref<16x1xf32, #tpu.memory_space<vmem>>, vector<16x1xf32>
    %16 = vector.broadcast %15 : vector<16x1xf32> to vector<16x128xf32>
    %17 = arith.mulf %14, %16 : vector<16x128xf32>
    %18 = arith.truncf %17 : vector<16x128xf32> to vector<16x128xbf16>
    %19 = arith.truncf %7 : vector<16x128xf32> to vector<16x128xbf16>
    %20 = arith.truncf %13 : vector<16x128xf32> to vector<16x128xbf16>
    %c0_12 = arith.constant 0 : index
    %c0_13 = arith.constant 0 : index
    %21 = vector.load %arg9[%c0_12, %c0_13] : memref<384x128xbf16, #tpu.memory_space<vmem>>, vector<128x128xbf16>
    %cst_14 = arith.constant dense<0.000000e+00> : vector<16x128xf32>
    %22 = tpu.matmul %18, %21, %cst_14 {dimension_numbers = #tpu.dot_dimension_numbers<[1], [0], [0], [1], [0, 0, 1, 1], [], []>} : vector<16x128xbf16>, vector<128x128xbf16>, vector<16x128xf32> -> vector<16x128xf32>
    %c128 = arith.constant 128 : index
    %c0_15 = arith.constant 0 : index
    %23 = vector.load %arg9[%c128, %c0_15] : memref<384x128xbf16, #tpu.memory_space<vmem>>, vector<128x128xbf16>
    %cst_16 = arith.constant dense<0.000000e+00> : vector<16x128xf32>
    %24 = tpu.matmul %19, %23, %cst_16 {dimension_numbers = #tpu.dot_dimension_numbers<[1], [0], [0], [1], [0, 0, 1, 1], [], []>} : vector<16x128xbf16>, vector<128x128xbf16>, vector<16x128xf32> -> vector<16x128xf32>
    %25 = arith.addf %22, %24 : vector<16x128xf32>
    %c256 = arith.constant 256 : index
    %c0_17 = arith.constant 0 : index
    %26 = vector.load %arg9[%c256, %c0_17] : memref<384x128xbf16, #tpu.memory_space<vmem>>, vector<128x128xbf16>
    %cst_18 = arith.constant dense<0.000000e+00> : vector<16x128xf32>
    %27 = tpu.matmul %20, %26, %cst_18 {dimension_numbers = #tpu.dot_dimension_numbers<[1], [0], [0], [1], [0, 0, 1, 1], [], []>} : vector<16x128xbf16>, vector<128x128xbf16>, vector<16x128xf32> -> vector<16x128xf32>
    %28 = arith.addf %25, %27 : vector<16x128xf32>
    %c0_19 = arith.constant 0 : index
    %c0_20 = arith.constant 0 : index
    %29 = vector.load %arg10[%c0_19, %c0_20] : memref<1x128xf32, #tpu.memory_space<vmem>>, vector<1x128xf32>
    %30 = vector.broadcast %29 : vector<1x128xf32> to vector<16x128xf32>
    %31 = arith.addf %28, %30 : vector<16x128xf32>
    %cst_21 = arith.constant 0.000000e+00 : f32
    %32 = vector.broadcast %cst_21 : f32 to vector<16x128xf32>
    %33 = arith.maximumf %31, %32 : vector<16x128xf32>
    %34 = vector.shape_cast %33 : vector<16x128xf32> to vector<2x8x128xf32>
    %c0_22 = arith.constant 0 : index
    %c0_23 = arith.constant 0 : index
    %35 = vector.load %arg11[%c0_22, %c0_23] : memref<8x128xf32, #tpu.memory_space<vmem>>, vector<8x128xf32>
    %36 = vector.shape_cast %35 : vector<8x128xf32> to vector<1x8x128xf32>
    %37 = vector.broadcast %36 : vector<1x8x128xf32> to vector<2x8x128xf32>
    %38 = arith.mulf %34, %37 : vector<2x8x128xf32>
    %cst_24 = arith.constant dense<0.000000e+00> : vector<2x128xf32>
    %39 = vector.multi_reduction <add>, %38, %cst_24 [1] : vector<2x8x128xf32> to vector<2x128xf32>
    %cst_25 = arith.constant dense<0.000000e+00> : vector<2xf32>
    %40 = vector.multi_reduction <add>, %39, %cst_25 [1] : vector<2x128xf32> to vector<2xf32>
    %41 = vector.shape_cast %40 : vector<2xf32> to vector<2x1xf32>
    %c0_26 = arith.constant 0 : index
    %c0_27 = arith.constant 0 : index
    %42 = vector.load %arg12[%c0_26, %c0_27] : memref<1x1xf32, #tpu.memory_space<vmem>>, vector<1x1xf32>
    %43 = vector.broadcast %42 : vector<1x1xf32> to vector<2x1xf32>
    %44 = arith.addf %41, %43 : vector<2x1xf32>
    %c0_28 = arith.constant 0 : index
    %c0_29 = arith.constant 0 : index
    %45 = vector.load %arg19[%c0_28, %c0_29] : memref<2x1xf32, #tpu.memory_space<vmem>>, vector<2x1xf32>
    tpu.vector_store %arg19[%c0_28, %c0_29], %44 {strides = array<i32>} : memref<2x1xf32, #tpu.memory_space<vmem>>, vector<2x1xf32>,
    %c0_30 = arith.constant 0 : index
    %c0_31 = arith.constant 0 : index
    %46 = vector.load %arg13[%c0_30, %c0_31] : memref<48x128xbf16, #tpu.memory_space<vmem>>, vector<48x128xbf16>
    %c0_32 = arith.constant 0 : index
    %c0_33 = arith.constant 0 : index
    %47 = vector.load %arg14[%c0_32, %c0_33] : memref<1x128xf32, #tpu.memory_space<vmem>>, vector<1x128xf32>
    %c0_34 = arith.constant 0 : index
    %c0_35 = arith.constant 0 : index
    %48 = vector.load %arg3[%c0_34, %c0_35] : memref<32x48xbf16, #tpu.memory_space<vmem>>, vector<32x48xbf16>
    %cst_36 = arith.constant dense<0.000000e+00> : vector<32x128xf32>
    %49 = tpu.matmul %48, %46, %cst_36 {dimension_numbers = #tpu.dot_dimension_numbers<[1], [0], [0], [1], [0, 0, 1, 1], [], []>} : vector<32x48xbf16>, vector<48x128xbf16>, vector<32x128xf32> -> vector<32x128xf32>
    %50 = vector.broadcast %47 : vector<1x128xf32> to vector<32x128xf32>
    %51 = arith.addf %49, %50 : vector<32x128xf32>
    %cst_37 = arith.constant 0.000000e+00 : f32
    %52 = vector.broadcast %cst_37 : f32 to vector<32x128xf32>
    %53 = arith.maximumf %51, %52 : vector<32x128xf32>
    %c0_38 = arith.constant 0 : index
    %c0_39 = arith.constant 0 : index
    %54 = vector.load %arg4[%c0_38, %c0_39] : memref<32x48xbf16, #tpu.memory_space<vmem>>, vector<32x48xbf16>
    %cst_40 = arith.constant dense<0.000000e+00> : vector<32x128xf32>
    %55 = tpu.matmul %54, %46, %cst_40 {dimension_numbers = #tpu.dot_dimension_numbers<[1], [0], [0], [1], [0, 0, 1, 1], [], []>} : vector<32x48xbf16>, vector<48x128xbf16>, vector<32x128xf32> -> vector<32x128xf32>
    %56 = vector.broadcast %47 : vector<1x128xf32> to vector<32x128xf32>
    %57 = arith.addf %55, %56 : vector<32x128xf32>
    %cst_41 = arith.constant 0.000000e+00 : f32
    %58 = vector.broadcast %cst_41 : f32 to vector<32x128xf32>
    %59 = arith.maximumf %57, %58 : vector<32x128xf32>
    %c1_i32_42 = arith.constant 1 : i32
    %60 = tpu.dynamic_rotate %59 by %c1_i32_42 dim 0 : vector<32x128xf32>, i32 -> vector<32x128xf32>
    %c0_43 = arith.constant 0 : index
    %c0_44 = arith.constant 0 : index
    %61 = vector.load %arg6[%c0_43, %c0_44] : memref<32x1xf32, #tpu.memory_space<vmem>>, vector<32x1xf32>
    %62 = vector.broadcast %61 : vector<32x1xf32> to vector<32x128xf32>
    %63 = arith.mulf %60, %62 : vector<32x128xf32>
    %64 = arith.truncf %63 : vector<32x128xf32> to vector<32x128xbf16>
    %65 = arith.truncf %53 : vector<32x128xf32> to vector<32x128xbf16>
    %66 = arith.truncf %59 : vector<32x128xf32> to vector<32x128xbf16>
    %c0_45 = arith.constant 0 : index
    %c0_46 = arith.constant 0 : index
    %67 = vector.load %arg15[%c0_45, %c0_46] : memref<384x128xbf16, #tpu.memory_space<vmem>>, vector<128x128xbf16>
    %cst_47 = arith.constant dense<0.000000e+00> : vector<32x128xf32>
    %68 = tpu.matmul %64, %67, %cst_47 {dimension_numbers = #tpu.dot_dimension_numbers<[1], [0], [0], [1], [0, 0, 1, 1], [], []>} : vector<32x128xbf16>, vector<128x128xbf16>, vector<32x128xf32> -> vector<32x128xf32>
    %c128_48 = arith.constant 128 : index
    %c0_49 = arith.constant 0 : index
    %69 = vector.load %arg15[%c128_48, %c0_49] : memref<384x128xbf16, #tpu.memory_space<vmem>>, vector<128x128xbf16>
    %cst_50 = arith.constant dense<0.000000e+00> : vector<32x128xf32>
    %70 = tpu.matmul %65, %69, %cst_50 {dimension_numbers = #tpu.dot_dimension_numbers<[1], [0], [0], [1], [0, 0, 1, 1], [], []>} : vector<32x128xbf16>, vector<128x128xbf16>, vector<32x128xf32> -> vector<32x128xf32>
    %71 = arith.addf %68, %70 : vector<32x128xf32>
    %c256_51 = arith.constant 256 : index
    %c0_52 = arith.constant 0 : index
    %72 = vector.load %arg15[%c256_51, %c0_52] : memref<384x128xbf16, #tpu.memory_space<vmem>>, vector<128x128xbf16>
    %cst_53 = arith.constant dense<0.000000e+00> : vector<32x128xf32>
    %73 = tpu.matmul %66, %72, %cst_53 {dimension_numbers = #tpu.dot_dimension_numbers<[1], [0], [0], [1], [0, 0, 1, 1], [], []>} : vector<32x128xbf16>, vector<128x128xbf16>, vector<32x128xf32> -> vector<32x128xf32>
    %74 = arith.addf %71, %73 : vector<32x128xf32>
    %c0_54 = arith.constant 0 : index
    %c0_55 = arith.constant 0 : index
    %75 = vector.load %arg16[%c0_54, %c0_55] : memref<1x128xf32, #tpu.memory_space<vmem>>, vector<1x128xf32>
    %76 = vector.broadcast %75 : vector<1x128xf32> to vector<32x128xf32>
    %77 = arith.addf %74, %76 : vector<32x128xf32>
    %cst_56 = arith.constant 0.000000e+00 : f32
    %78 = vector.broadcast %cst_56 : f32 to vector<32x128xf32>
    %79 = arith.maximumf %77, %78 : vector<32x128xf32>
    %80 = vector.shape_cast %79 : vector<32x128xf32> to vector<2x16x128xf32>
    %c0_57 = arith.constant 0 : index
    %c0_58 = arith.constant 0 : index
    %81 = vector.load %arg17[%c0_57, %c0_58] : memref<16x128xf32, #tpu.memory_space<vmem>>, vector<16x128xf32>
    %82 = vector.shape_cast %81 : vector<16x128xf32> to vector<1x16x128xf32>
    %83 = vector.broadcast %82 : vector<1x16x128xf32> to vector<2x16x128xf32>
    %84 = arith.mulf %80, %83 : vector<2x16x128xf32>
    %cst_59 = arith.constant dense<0.000000e+00> : vector<2x128xf32>
    %85 = vector.multi_reduction <add>, %84, %cst_59 [1] : vector<2x16x128xf32> to vector<2x128xf32>
    %cst_60 = arith.constant dense<0.000000e+00> : vector<2xf32>
    %86 = vector.multi_reduction <add>, %85, %cst_60 [1] : vector<2x128xf32> to vector<2xf32>
    %87 = vector.shape_cast %86 : vector<2xf32> to vector<2x1xf32>
    %c0_61 = arith.constant 0 : index
    %c0_62 = arith.constant 0 : index
    %88 = vector.load %arg18[%c0_61, %c0_62] : memref<1x1xf32, #tpu.memory_space<vmem>>, vector<1x1xf32>
    %89 = vector.broadcast %88 : vector<1x1xf32> to vector<2x1xf32>
    %90 = arith.addf %87, %89 : vector<2x1xf32>
    %c0_63 = arith.constant 0 : index
    %c0_64 = arith.constant 0 : index
    %91 = vector.load %arg20[%c0_63, %c0_64] : memref<2x1xf32, #tpu.memory_space<vmem>>, vector<2x1xf32>
    tpu.vector_store %arg20[%c0_63, %c0_64], %90 {strides = array<i32>} : memref<2x1xf32, #tpu.memory_space<vmem>>, vector<2x1xf32>,
    return
  }
  func.func @transform_0(%arg0: i32) -> (i32, i32) {
    %c0_i32 = arith.constant 0 : i32
    %c0_i32_0 = arith.constant 0 : i32
    return %arg0, %c0_i32 : i32, i32
  }
  func.func @transform_1(%arg0: i32) -> (i32, i32) {
    %c0_i32 = arith.constant 0 : i32
    %c0_i32_0 = arith.constant 0 : i32
    return %arg0, %c0_i32 : i32, i32
  }
  func.func @transform_2(%arg0: i32) -> (i32, i32) {
    %c0_i32 = arith.constant 0 : i32
    %c0_i32_0 = arith.constant 0 : i32
    return %arg0, %c0_i32 : i32, i32
  }
  func.func @transform_3(%arg0: i32) -> (i32, i32) {
    %c0_i32 = arith.constant 0 : i32
    %c0_i32_0 = arith.constant 0 : i32
    return %arg0, %c0_i32 : i32, i32
  }
  func.func @transform_4(%arg0: i32) -> (i32, i32) {
    %c0_i32 = arith.constant 0 : i32
    %c0_i32_0 = arith.constant 0 : i32
    %c0_i32_1 = arith.constant 0 : i32
    return %c0_i32, %c0_i32_0 : i32, i32
  }
  func.func @transform_5(%arg0: i32) -> (i32, i32) {
    %c0_i32 = arith.constant 0 : i32
    %c0_i32_0 = arith.constant 0 : i32
    %c0_i32_1 = arith.constant 0 : i32
    return %c0_i32, %c0_i32_0 : i32, i32
  }
  func.func @transform_6(%arg0: i32) -> (i32, i32) {
    %c0_i32 = arith.constant 0 : i32
    %c0_i32_0 = arith.constant 0 : i32
    %c0_i32_1 = arith.constant 0 : i32
    return %c0_i32, %c0_i32_0 : i32, i32
  }
  func.func @transform_7(%arg0: i32) -> (i32, i32) {
    %c0_i32 = arith.constant 0 : i32
    %c0_i32_0 = arith.constant 0 : i32
    %c0_i32_1 = arith.constant 0 : i32
    return %c0_i32, %c0_i32_0 : i32, i32
  }
  func.func @transform_8(%arg0: i32) -> (i32, i32) {
    %c0_i32 = arith.constant 0 : i32
    %c0_i32_0 = arith.constant 0 : i32
    %c0_i32_1 = arith.constant 0 : i32
    return %c0_i32, %c0_i32_0 : i32, i32
  }
  func.func @transform_9(%arg0: i32) -> (i32, i32) {
    %c0_i32 = arith.constant 0 : i32
    %c0_i32_0 = arith.constant 0 : i32
    %c0_i32_1 = arith.constant 0 : i32
    return %c0_i32, %c0_i32_0 : i32, i32
  }
  func.func @transform_10(%arg0: i32) -> (i32, i32) {
    %c0_i32 = arith.constant 0 : i32
    %c0_i32_0 = arith.constant 0 : i32
    %c0_i32_1 = arith.constant 0 : i32
    return %c0_i32, %c0_i32_0 : i32, i32
  }
  func.func @transform_11(%arg0: i32) -> (i32, i32) {
    %c0_i32 = arith.constant 0 : i32
    %c0_i32_0 = arith.constant 0 : i32
    %c0_i32_1 = arith.constant 0 : i32
    return %c0_i32, %c0_i32_0 : i32, i32
  }
  func.func @transform_12(%arg0: i32) -> (i32, i32) {
    %c0_i32 = arith.constant 0 : i32
    %c0_i32_0 = arith.constant 0 : i32
    %c0_i32_1 = arith.constant 0 : i32
    return %c0_i32, %c0_i32_0 : i32, i32
  }
  func.func @transform_13(%arg0: i32) -> (i32, i32) {
    %c0_i32 = arith.constant 0 : i32
    %c0_i32_0 = arith.constant 0 : i32
    %c0_i32_1 = arith.constant 0 : i32
    return %c0_i32, %c0_i32_0 : i32, i32
  }
  func.func @transform_14(%arg0: i32) -> (i32, i32) {
    %c0_i32 = arith.constant 0 : i32
    %c0_i32_0 = arith.constant 0 : i32
    %c0_i32_1 = arith.constant 0 : i32
    return %c0_i32, %c0_i32_0 : i32, i32
  }
  func.func @transform_15(%arg0: i32) -> (i32, i32) {
    %c0_i32 = arith.constant 0 : i32
    %c0_i32_0 = arith.constant 0 : i32
    %c0_i32_1 = arith.constant 0 : i32
    return %c0_i32, %c0_i32_0 : i32, i32
  }
  func.func @transform_16(%arg0: i32) -> (i32, i32) {
    %c0_i32 = arith.constant 0 : i32
    %c0_i32_0 = arith.constant 0 : i32
    %c0_i32_1 = arith.constant 0 : i32
    return %c0_i32, %c0_i32_0 : i32, i32
  }
  func.func @transform_17(%arg0: i32) -> (i32, i32) {
    %c0_i32 = arith.constant 0 : i32
    %c0_i32_0 = arith.constant 0 : i32
    %c0_i32_1 = arith.constant 0 : i32
    return %c0_i32, %c0_i32_0 : i32, i32
  }
  func.func @transform_18(%arg0: i32) -> (i32, i32) {
    %c0_i32 = arith.constant 0 : i32
    %c0_i32_0 = arith.constant 0 : i32
    return %arg0, %c0_i32 : i32, i32
  }
  func.func @transform_19(%arg0: i32) -> (i32, i32) {
    %c0_i32 = arith.constant 0 : i32
    %c0_i32_0 = arith.constant 0 : i32
    return %arg0, %c0_i32 : i32, i32
  }
}

</mosaic_0001>

<llo_original>
// kernel: start_end_regression.1
$region0: #{start_end_regression.1}
  #allocation0 [shape = 'u32[]', space=smem, size = 0x4, offset = 0x4, fixed_abs, tag = 'smem constant byte address 0x4 - core index']
  #allocation1 [shape = 'u32[144,128]{1,0:T(1,128)}', space=vmem, size = 0x12000, scoped, tag = 'internal scratch']
  #allocation2 [shape = 'f32[1,1]{1,0:T(1,128)S(1)}', space=vmem, size = 0x200, scoped, tag = 'scoped memory for start_end_regression.1']
  #allocation3 [shape = 'f32[1,1]{1,0:T(1,128)S(1)}', space=vmem, size = 0x200, scoped, tag = 'scoped memory for start_end_regression.1']
  %s0 = inlined_call_operand.vmem [shape: bf16[16,48], index: 0, kind: input, shape index: {}]
  %s1 = inlined_call_operand.vmem [shape: bf16[16,48], index: 1, kind: input, shape index: {}]
  %s2 = inlined_call_operand.vmem [shape: bf16[32,48], index: 2, kind: input, shape index: {}]
  %s3 = inlined_call_operand.vmem [shape: bf16[32,48], index: 3, kind: input, shape index: {}]
  %s4 = inlined_call_operand.vmem [shape: f32[16,1], index: 4, kind: input, shape index: {}]
  %s5 = inlined_call_operand.vmem [shape: f32[32,1], index: 5, kind: input, shape index: {}]
  %s6 = inlined_call_operand.vmem [shape: bf16[48,128], index: 6, kind: input, shape index: {}]
  %s7 = inlined_call_operand.vmem [shape: f32[1,128], index: 7, kind: input, shape index: {}]
  %s8 = inlined_call_operand.vmem [shape: bf16[384,128], index: 8, kind: input, shape index: {}]
  %s9 = inlined_call_operand.vmem [shape: f32[1,128], index: 9, kind: input, shape index: {}]
  %s10 = inlined_call_operand.vmem [shape: f32[8,128], index: 10, kind: input, shape index: {}]
  %s11 = inlined_call_operand.<no memory space> [shape: f32[1,1], index: 11, kind: input, shape index: {}]
  %s12 = inlined_call_operand.vmem [shape: bf16[48,128], index: 12, kind: input, shape index: {}]
  %s13 = inlined_call_operand.vmem [shape: f32[1,128], index: 13, kind: input, shape index: {}]
  %s14 = inlined_call_operand.vmem [shape: bf16[384,128], index: 14, kind: input, shape index: {}]
  %s15 = inlined_call_operand.vmem [shape: f32[1,128], index: 15, kind: input, shape index: {}]
  %s16 = inlined_call_operand.vmem [shape: f32[16,128], index: 16, kind: input, shape index: {}]
  %s17 = inlined_call_operand.<no memory space> [shape: f32[1,1], index: 17, kind: input, shape index: {}]
  %s18 = inlined_call_operand.vmem [shape: f32[2,1], index: 18, kind: output, shape index: {0}]
  %s19 = inlined_call_operand.vmem [shape: f32[2,1], index: 19, kind: output, shape index: {1}]
  %20 = xla_tuple %s18, %s19
  %s21 = sld [smem:[#allocation0]]
  $region90: #{start_end_regression.1} parent=0
    _
  %s23 = ssub.s32 1, %s21
  %s24 = scalar_select 0, %s23, %s21
  %v25 = vstv %s11
  %26 = vst [vmem:[#allocation2] sm:$0x1] %v25
  %v27 = vstv %s17
  %28 = vst [vmem:[#allocation3] sm:$0x1] %v27
  // Predicated region
  $region2: #{start_end_regression.1} parent=0 // pred_check
    _
  $region3: #{start_end_regression.1} parent=0 // pred_check_branch
    %30 = sbr.rel (0) target = $region5
  $region4: #{start_end_regression.1} parent=0 // pred_region
    _
  $region5: #{start_end_regression.1} parent=0 // pred_fallthru
    _
  // Predicated region
  $region6: #{start_end_regression.1} parent=0 // pred_check
    _
  $region7: #{start_end_regression.1} parent=0 // pred_check_branch
    %32 = sbr.rel (0) target = $region9
  $region8: #{start_end_regression.1} parent=0 // pred_region
    _
  $region9: #{start_end_regression.1} parent=0 // pred_fallthru
    _
  // Predicated region
  $region10: #{start_end_regression.1} parent=0 // pred_check
    _
  $region11: #{start_end_regression.1} parent=0 // pred_check_branch
    %34 = sbr.rel (0) target = $region13
  $region12: #{start_end_regression.1} parent=0 // pred_region
    _
  $region13: #{start_end_regression.1} parent=0 // pred_fallthru
    _
  // Predicated region
  $region14: #{start_end_regression.1} parent=0 // pred_check
    _
  $region15: #{start_end_regression.1} parent=0 // pred_check_branch
    %36 = sbr.rel (0) target = $region17
  $region16: #{start_end_regression.1} parent=0 // pred_region
    _
  $region17: #{start_end_regression.1} parent=0 // pred_fallthru
    _
  // Predicated region
  $region18: #{start_end_regression.1} parent=0 // pred_check
    _
  $region19: #{start_end_regression.1} parent=0 // pred_check_branch
    %38 = sbr.rel (0) target = $region21
  $region20: #{start_end_regression.1} parent=0 // pred_region
    _
  $region21: #{start_end_regression.1} parent=0 // pred_fallthru
    _
  // Predicated region
  $region22: #{start_end_regression.1} parent=0 // pred_check
    _
  $region23: #{start_end_regression.1} parent=0 // pred_check_branch
    %40 = sbr.rel (0) target = $region25
  $region24: #{start_end_regression.1} parent=0 // pred_region
    _
  $region25: #{start_end_regression.1} parent=0 // pred_fallthru
    _
  // Predicated region
  $region26: #{start_end_regression.1} parent=0 // pred_check
    _
  $region27: #{start_end_regression.1} parent=0 // pred_check_branch
    %42 = sbr.rel (0) target = $region29
  $region28: #{start_end_regression.1} parent=0 // pred_region
    _
  $region29: #{start_end_regression.1} parent=0 // pred_fallthru
    _
  // Predicated region
  $region30: #{start_end_regression.1} parent=0 // pred_check
    _
  $region31: #{start_end_regression.1} parent=0 // pred_check_branch
    %44 = sbr.rel (0) target = $region33
  $region32: #{start_end_regression.1} parent=0 // pred_region
    _
  $region33: #{start_end_regression.1} parent=0 // pred_fallthru
    _
  // Predicated region
  $region34: #{start_end_regression.1} parent=0 // pred_check
    _
  $region35: #{start_end_regression.1} parent=0 // pred_check_branch
    %46 = sbr.rel (0) target = $region37
  $region36: #{start_end_regression.1} parent=0 // pred_region
    _
  $region37: #{start_end_regression.1} parent=0 // pred_fallthru
    _
  // Predicated region
  $region38: #{start_end_regression.1} parent=0 // pred_check
    _
  $region39: #{start_end_regression.1} parent=0 // pred_check_branch
    %48 = sbr.rel (0) target = $region41
  $region40: #{start_end_regression.1} parent=0 // pred_region
    _
  $region41: #{start_end_regression.1} parent=0 // pred_fallthru
    _
  // Predicated region
  $region42: #{start_end_regression.1} parent=0 // pred_check
    _
  $region43: #{start_end_regression.1} parent=0 // pred_check_branch
    %50 = sbr.rel (0) target = $region45
  $region44: #{start_end_regression.1} parent=0 // pred_region
    _
  $region45: #{start_end_regression.1} parent=0 // pred_fallthru
    _
  // Predicated region
  $region46: #{start_end_regression.1} parent=0 // pred_check
    _
  $region47: #{start_end_regression.1} parent=0 // pred_check_branch
    %52 = sbr.rel (0) target = $region49
  $region48: #{start_end_regression.1} parent=0 // pred_region
    _
  $region49: #{start_end_regression.1} parent=0 // pred_fallthru
    _
  // Predicated region
  $region50: #{start_end_regression.1} parent=0 // pred_check
    _
  $region51: #{start_end_regression.1} parent=0 // pred_check_branch
    %54 = sbr.rel (0) target = $region53
  $region52: #{start_end_regression.1} parent=0 // pred_region
    _
  $region53: #{start_end_regression.1} parent=0 // pred_fallthru
    _
  // Predicated region
  $region54: #{start_end_regression.1} parent=0 // pred_check
    _
  $region55: #{start_end_regression.1} parent=0 // pred_check_branch
    %56 = sbr.rel (0) target = $region57
  $region56: #{start_end_regression.1} parent=0 // pred_region
    _
  $region57: #{start_end_regression.1} parent=0 // pred_fallthru
    _
  // Predicated region
  $region58: #{start_end_regression.1} parent=0 // pred_check
    _
  $region59: #{start_end_regression.1} parent=0 // pred_check_branch
    %58 = sbr.rel (0) target = $region61
  $region60: #{start_end_regression.1} parent=0 // pred_region
    _
  $region61: #{start_end_regression.1} parent=0 // pred_fallthru
    _
  // Predicated region
  $region62: #{start_end_regression.1} parent=0 // pred_check
    _
  $region63: #{start_end_regression.1} parent=0 // pred_check_branch
    %60 = sbr.rel (0) target = $region65
  $region64: #{start_end_regression.1} parent=0 // pred_region
    _
  $region65: #{start_end_regression.1} parent=0 // pred_fallthru
    _
  // Predicated region
  $region66: #{start_end_regression.1} parent=0 // pred_check
    _
  $region67: #{start_end_regression.1} parent=0 // pred_check_branch
    %62 = sbr.rel (0) target = $region69
  $region68: #{start_end_regression.1} parent=0 // pred_region
    _
  $region69: #{start_end_regression.1} parent=0 // pred_fallthru
    _
  // Predicated region
  $region70: #{start_end_regression.1} parent=0 // pred_check
    _
  $region71: #{start_end_regression.1} parent=0 // pred_check_branch
    %64 = sbr.rel (0) target = $region73
  $region72: #{start_end_regression.1} parent=0 // pred_region
    _
  $region73: #{start_end_regression.1} parent=0 // pred_fallthru
    _
  %v66 = vld [vmem:[%s6] sm:$0xf]
  %v67 = vld [vmem:[%s6 + $0x4] sm:$0xf]
  %v68 = vld [vmem:[%s6 + $0x8] sm:$0xf]
  %v69 = vld [vmem:[%s6 + $0xc] sm:$0xf]
  %v70 = vld [vmem:[%s6 + $0x10] sm:$0xf]
  %v71 = vld [vmem:[%s6 + $0x14] sm:$0xf]
  %v72 = vld [vmem:[%s7] sm:$0x1]
  %v73 = vld [vmem:[%s0] sm:$0xf]
  %v74 = vld [vmem:[%s0 + $0x4] sm:$0xf]
  %v76 = vlaneseq
  %v77 = vshrl.u32 %v76, 7
  %v78 = vsub.s32 0, %v77
  %v79 = vrot.slane %v72, %v78
  %v83 = vunpack.c.l.b16 %v73
  %v84 = vunpack.c.l.b16 %v74
  %v85 = vpack.c.b16 %v84, %v83
  %v92 = vunpack.c.l.b16 %v66
  %v93 = vunpack.c.l.b16 %v67
  %v94 = vunpack.c.l.b16 %v68
  %v95 = vunpack.c.l.b16 %v69
  %v96 = vunpack.c.l.b16 %v70
  %v97 = vunpack.c.l.b16 %v71
  %v98 = vpack.c.b16 %v93, %v92
  %v99 = vpack.c.b16 %v95, %v94
  %v100 = vpack.c.b16 %v97, %v96
  %vm104 = vcmask 392192
  %v106 = vsel %vm104, %v85, 0
  %108 = vmatprep.subr.bf16.mxu0 0
  %109 = vmatpush1.bf16.msra.mxu0 %v98
  %110 = vmatprep.subr.bf16.mxu0 0
  %111 = vmatpush1.bf16.msra.mxu0 %v99
  %112 = vmatprep.subr.bf16.mxu0 0
  %113 = vmatpush1.bf16.msra.mxu0 %v100
  %114 = vmatprep.subr.bf16.mxu0 0
  %115 = vmatpush1.bf16.msra.mxu0 0
  %116 = vmatprep.subr.bf16.mxu0 0
  %117 = vmatpush1.bf16.msra.mxu0 0
  %118 = vmatprep.subr.bf16.mxu0 0
  %119 = vmatpush1.bf16.msra.mxu0 0
  %120 = vmatprep.subr.bf16.mxu0 0
  %121 = vmatpush1.bf16.msra.mxu0 0
  %122 = vmatprep.subr.bf16.mxu0 0
  %123 = vmatpush1.bf16.msra.mxu0 0
  %124 = vmatprep.subr.bf16.mxu0 0
  %125 = vmatpush1.bf16.msra.mxu0 0
  %126 = vmatprep.subr.bf16.mxu0 0
  %127 = vmatpush1.bf16.msra.mxu0 0
  %128 = vmatprep.subr.bf16.mxu0 0
  %129 = vmatpush1.bf16.msra.mxu0 0
  %130 = vmatprep.subr.bf16.mxu0 0
  %131 = vmatpush1.bf16.msra.mxu0 0
  %132 = vmatprep.subr.bf16.mxu0 0
  %133 = vmatpush1.bf16.msra.mxu0 0
  %134 = vmatprep.subr.bf16.mxu0 0
  %135 = vmatpush1.bf16.msra.mxu0 0
  %136 = vmatprep.subr.bf16.mxu0 0
  %137 = vmatpush1.bf16.msra.mxu0 0
  %138 = vmatprep.subr.bf16.mxu0 0
  %139 = vmatpush1.bf16.msra.mxu0 0
  %140 = vmatprep.mubr.bf16.mxu0 0
  %141 = vmatmul.mubr.bf16.gmra.mrb[0].mxu0 %v106
  %v142 = vpop.f32.mrb[0].mxu0
  %v143 = vadd.f32 %v79, %v142
  %v144 = vpop.f32.mrb[0].mxu0
  %v145 = vpop.f32.mrb[0].mxu0
  %v146 = vadd.f32 %v79, %v145
  %v147 = vpop.f32.mrb[0].mxu0
  %148 = vdwg.mxu0
  %v149 = vmax.f32 %v143, 0.0
  %v150 = vmax.f32 %v146, 0.0
  %v151 = vld [vmem:[%s1] sm:$0xf]
  %v152 = vld [vmem:[%s1 + $0x4] sm:$0xf]
  %v155 = vunpack.c.l.b16 %v151
  %v156 = vunpack.c.l.b16 %v152
  %v157 = vpack.c.b16 %v156, %v155
  %v159 = vsel %vm104, %v157, 0
  %161 = vmatprep.subr.bf16.mxu0 0
  %162 = vmatpush1.bf16.msra.mxu0 %v98
  %163 = vmatprep.subr.bf16.mxu0 0
  %164 = vmatpush1.bf16.msra.mxu0 %v99
  %165 = vmatprep.subr.bf16.mxu0 0
  %166 = vmatpush1.bf16.msra.mxu0 %v100
  %167 = vmatprep.subr.bf16.mxu0 0
  %168 = vmatpush1.bf16.msra.mxu0 0
  %169 = vmatprep.subr.bf16.mxu0 0
  %170 = vmatpush1.bf16.msra.mxu0 0
  %171 = vmatprep.subr.bf16.mxu0 0
  %172 = vmatpush1.bf16.msra.mxu0 0
  %173 = vmatprep.subr.bf16.mxu0 0
  %174 = vmatpush1.bf16.msra.mxu0 0
  %175 = vmatprep.subr.bf16.mxu0 0
  %176 = vmatpush1.bf16.msra.mxu0 0
  %177 = vmatprep.subr.bf16.mxu0 0
  %178 = vmatpush1.bf16.msra.mxu0 0
  %179 = vmatprep.subr.bf16.mxu0 0
  %180 = vmatpush1.bf16.msra.mxu0 0
  %181 = vmatprep.subr.bf16.mxu0 0
  %182 = vmatpush1.bf16.msra.mxu0 0
  %183 = vmatprep.subr.bf16.mxu0 0
  %184 = vmatpush1.bf16.msra.mxu0 0
  %185 = vmatprep.subr.bf16.mxu0 0
  %186 = vmatpush1.bf16.msra.mxu0 0
  %187 = vmatprep.subr.bf16.mxu0 0
  %188 = vmatpush1.bf16.msra.mxu0 0
  %189 = vmatprep.subr.bf16.mxu0 0
  %190 = vmatpush1.bf16.msra.mxu0 0
  %191 = vmatprep.subr.bf16.mxu0 0
  %192 = vmatpush1.bf16.msra.mxu0 0
  %193 = vmatprep.mubr.bf16.mxu0 0
  %194 = vmatmul.mubr.bf16.gmra.mrb[0].mxu0 %v159
  %v195 = vpop.f32.mrb[0].mxu0
  %v196 = vadd.f32 %v79, %v195
  %v197 = vpop.f32.mrb[0].mxu0
  %v198 = vpop.f32.mrb[0].mxu0
  %v199 = vadd.f32 %v79, %v198
  %v200 = vpop.f32.mrb[0].mxu0
  %201 = vdwg.mxu0
  %v202 = vmax.f32 %v196, 0.0
  %v203 = vmax.f32 %v199, 0.0
  %v204 = vrot.slane %v202, 7
  %v205 = vrot.slane %v203, 7
  %v206 = vlaneseq
  %v207 = vshrl.u32 %v206, 7
  %vm208 = vcmp.lt.s32.totalorder %v207, 1
  %v209 = vsel %vm208, %v204, %v205
  %v210 = vsel %vm208, %v205, %v204
  %v211 = vld [vmem:[%s4] sm:$0xff]
  %v212 = vld [vmem:[%s4 + $0x8] sm:$0xff]
  %214 = vset.pattern.permute.xlu0 0
  %215 = vperm.xlu0 %214, %v211
  %v216 = vpop.permute.xlu0 %215
  %219 = vset.pattern.permute.xlu0 0
  %220 = vperm.xlu0 %219, %v212
  %v221 = vpop.permute.xlu0 %220
  %v223 = vmul.f32 %v210, %v216
  %v224 = vmul.f32 %v209, %v221
  %v225 = vpack.c.bf16 %v224, %v223
  %v226 = vpack.c.bf16 %v150, %v149
  %v227 = vpack.c.bf16 %v203, %v202
  %v228 = vld [vmem:[%s8] sm:$0xf]
  %v229 = vld [vmem:[%s8 + $0x4] sm:$0xf]
  %v230 = vld [vmem:[%s8 + $0x8] sm:$0xf]
  %v231 = vld [vmem:[%s8 + $0xc] sm:$0xf]
  %v232 = vld [vmem:[%s8 + $0x10] sm:$0xf]
  %v233 = vld [vmem:[%s8 + $0x14] sm:$0xf]
  %v234 = vld [vmem:[%s8 + $0x18] sm:$0xf]
  %v235 = vld [vmem:[%s8 + $0x1c] sm:$0xf]
  %v236 = vld [vmem:[%s8 + $0x20] sm:$0xf]
  %v237 = vld [vmem:[%s8 + $0x24] sm:$0xf]
  %v238 = vld [vmem:[%s8 + $0x28] sm:$0xf]
  %v239 = vld [vmem:[%s8 + $0x2c] sm:$0xf]
  %v240 = vld [vmem:[%s8 + $0x30] sm:$0xf]
  %v241 = vld [vmem:[%s8 + $0x34] sm:$0xf]
  %v242 = vld [vmem:[%s8 + $0x38] sm:$0xf]
  %v243 = vld [vmem:[%s8 + $0x3c] sm:$0xf]
  %v244 = vld [vmem:[%s8 + $0x40] sm:$0xf]
  %v245 = vld [vmem:[%s8 + $0x44] sm:$0xf]
  %v246 = vld [vmem:[%s8 + $0x48] sm:$0xf]
  %v247 = vld [vmem:[%s8 + $0x4c] sm:$0xf]
  %v248 = vld [vmem:[%s8 + $0x50] sm:$0xf]
  %v249 = vld [vmem:[%s8 + $0x54] sm:$0xf]
  %v250 = vld [vmem:[%s8 + $0x58] sm:$0xf]
  %v251 = vld [vmem:[%s8 + $0x5c] sm:$0xf]
  %v252 = vld [vmem:[%s8 + $0x60] sm:$0xf]
  %v253 = vld [vmem:[%s8 + $0x64] sm:$0xf]
  %v254 = vld [vmem:[%s8 + $0x68] sm:$0xf]
  %v255 = vld [vmem:[%s8 + $0x6c] sm:$0xf]
  %v256 = vld [vmem:[%s8 + $0x70] sm:$0xf]
  %v257 = vld [vmem:[%s8 + $0x74] sm:$0xf]
  %v258 = vld [vmem:[%s8 + $0x78] sm:$0xf]
  %v259 = vld [vmem:[%s8 + $0x7c] sm:$0xf]
  %v276 = vunpack.c.l.b16 %v244
  %v277 = vunpack.c.l.b16 %v245
  %v278 = vunpack.c.l.b16 %v246
  %v279 = vunpack.c.l.b16 %v247
  %v280 = vunpack.c.l.b16 %v248
  %v281 = vunpack.c.l.b16 %v249
  %v282 = vunpack.c.l.b16 %v250
  %v283 = vunpack.c.l.b16 %v251
  %v284 = vunpack.c.l.b16 %v252
  %v285 = vunpack.c.l.b16 %v253
  %v286 = vunpack.c.l.b16 %v254
  %v287 = vunpack.c.l.b16 %v255
  %v288 = vunpack.c.l.b16 %v256
  %v289 = vunpack.c.l.b16 %v257
  %v290 = vunpack.c.l.b16 %v258
  %v291 = vunpack.c.l.b16 %v259
  %v292 = vpack.c.b16 %v277, %v276
  %v293 = vpack.c.b16 %v279, %v278
  %v294 = vpack.c.b16 %v281, %v280
  %v295 = vpack.c.b16 %v283, %v282
  %v296 = vpack.c.b16 %v285, %v284
  %v297 = vpack.c.b16 %v287, %v286
  %v298 = vpack.c.b16 %v289, %v288
  %v299 = vpack.c.b16 %v291, %v290
  %308 = vmatprep.subr.bf16.mxu0 0
  %309 = vmatpush1.bf16.msra.mxu0 %v292
  %310 = vmatprep.subr.bf16.mxu0 0
  %311 = vmatpush1.bf16.msra.mxu0 %v293
  %312 = vmatprep.subr.bf16.mxu0 0
  %313 = vmatpush1.bf16.msra.mxu0 %v294
  %314 = vmatprep.subr.bf16.mxu0 0
  %315 = vmatpush1.bf16.msra.mxu0 %v295
  %316 = vmatprep.subr.bf16.mxu0 0
  %317 = vmatpush1.bf16.msra.mxu0 %v296
  %318 = vmatprep.subr.bf16.mxu0 0
  %319 = vmatpush1.bf16.msra.mxu0 %v297
  %320 = vmatprep.subr.bf16.mxu0 0
  %321 = vmatpush1.bf16.msra.mxu0 %v298
  %322 = vmatprep.subr.bf16.mxu0 0
  %323 = vmatpush1.bf16.msra.mxu0 %v299
  %324 = vmatprep.subr.bf16.mxu0 0
  %325 = vmatpush1.bf16.msra.mxu0 0
  %326 = vmatprep.subr.bf16.mxu0 0
  %327 = vmatpush1.bf16.msra.mxu0 0
  %328 = vmatprep.subr.bf16.mxu0 0
  %329 = vmatpush1.bf16.msra.mxu0 0
  %330 = vmatprep.subr.bf16.mxu0 0
  %331 = vmatpush1.bf16.msra.mxu0 0
  %332 = vmatprep.subr.bf16.mxu0 0
  %333 = vmatpush1.bf16.msra.mxu0 0
  %334 = vmatprep.subr.bf16.mxu0 0
  %335 = vmatpush1.bf16.msra.mxu0 0
  %336 = vmatprep.subr.bf16.mxu0 0
  %337 = vmatpush1.bf16.msra.mxu0 0
  %338 = vmatprep.subr.bf16.mxu0 0
  %339 = vmatpush1.bf16.msra.mxu0 0
  %340 = vmatprep.mubr.bf16.mxu0 0
  %341 = vmatmul.mubr.bf16.gmra.mrb[0].mxu0 %v226
  %v342 = vpop.f32.mrb[0].mxu0
  %v343 = vadd.f32 0.0, %v342
  %v344 = vpop.f32.mrb[0].mxu0
  %v345 = vpop.f32.mrb[0].mxu0
  %v346 = vadd.f32 0.0, %v345
  %v347 = vpop.f32.mrb[0].mxu0
  %348 = vdwg.mxu0
  %v365 = vunpack.c.l.b16 %v228
  %v366 = vunpack.c.l.b16 %v229
  %v367 = vunpack.c.l.b16 %v230
  %v368 = vunpack.c.l.b16 %v231
  %v369 = vunpack.c.l.b16 %v232
  %v370 = vunpack.c.l.b16 %v233
  %v371 = vunpack.c.l.b16 %v234
  %v372 = vunpack.c.l.b16 %v235
  %v373 = vunpack.c.l.b16 %v236
  %v374 = vunpack.c.l.b16 %v237
  %v375 = vunpack.c.l.b16 %v238
  %v376 = vunpack.c.l.b16 %v239
  %v377 = vunpack.c.l.b16 %v240
  %v378 = vunpack.c.l.b16 %v241
  %v379 = vunpack.c.l.b16 %v242
  %v380 = vunpack.c.l.b16 %v243
  %v381 = vpack.c.b16 %v366, %v365
  %v382 = vpack.c.b16 %v368, %v367
  %v383 = vpack.c.b16 %v370, %v369
  %v384 = vpack.c.b16 %v372, %v371
  %v385 = vpack.c.b16 %v374, %v373
  %v386 = vpack.c.b16 %v376, %v375
  %v387 = vpack.c.b16 %v378, %v377
  %v388 = vpack.c.b16 %v380, %v379
  %397 = vmatprep.subr.bf16.mxu0 0
  %398 = vmatpush1.bf16.msra.mxu0 %v381
  %399 = vmatprep.subr.bf16.mxu0 0
  %400 = vmatpush1.bf16.msra.mxu0 %v382
  %401 = vmatprep.subr.bf16.mxu0 0
  %402 = vmatpush1.bf16.msra.mxu0 %v383
  %403 = vmatprep.subr.bf16.mxu0 0
  %404 = vmatpush1.bf16.msra.mxu0 %v384
  %405 = vmatprep.subr.bf16.mxu0 0
  %406 = vmatpush1.bf16.msra.mxu0 %v385
  %407 = vmatprep.subr.bf16.mxu0 0
  %408 = vmatpush1.bf16.msra.mxu0 %v386
  %409 = vmatprep.subr.bf16.mxu0 0
  %410 = vmatpush1.bf16.msra.mxu0 %v387
  %411 = vmatprep.subr.bf16.mxu0 0
  %412 = vmatpush1.bf16.msra.mxu0 %v388
  %413 = vmatprep.subr.bf16.mxu0 0
  %414 = vmatpush1.bf16.msra.mxu0 0
  %415 = vmatprep.subr.bf16.mxu0 0
  %416 = vmatpush1.bf16.msra.mxu0 0
  %417 = vmatprep.subr.bf16.mxu0 0
  %418 = vmatpush1.bf16.msra.mxu0 0
  %419 = vmatprep.subr.bf16.mxu0 0
  %420 = vmatpush1.bf16.msra.mxu0 0
  %421 = vmatprep.subr.bf16.mxu0 0
  %422 = vmatpush1.bf16.msra.mxu0 0
  %423 = vmatprep.subr.bf16.mxu0 0
  %424 = vmatpush1.bf16.msra.mxu0 0
  %425 = vmatprep.subr.bf16.mxu0 0
  %426 = vmatpush1.bf16.msra.mxu0 0
  %427 = vmatprep.subr.bf16.mxu0 0
  %428 = vmatpush1.bf16.msra.mxu0 0
  %429 = vmatprep.mubr.bf16.mxu0 0
  %430 = vmatmul.mubr.bf16.gmra.mrb[0].mxu0 %v225
  %v431 = vpop.f32.mrb[0].mxu0
  %v432 = vadd.f32 %v343, %v431
  %v433 = vpop.f32.mrb[0].mxu0
  %v434 = vpop.f32.mrb[0].mxu0
  %v435 = vadd.f32 %v346, %v434
  %v436 = vpop.f32.mrb[0].mxu0
  %437 = vdwg.mxu0
  %v438 = vld [vmem:[%s8 + $0x80] sm:$0xf]
  %v439 = vld [vmem:[%s8 + $0x84] sm:$0xf]
  %v440 = vld [vmem:[%s8 + $0x88] sm:$0xf]
  %v441 = vld [vmem:[%s8 + $0x8c] sm:$0xf]
  %v442 = vld [vmem:[%s8 + $0x90] sm:$0xf]
  %v443 = vld [vmem:[%s8 + $0x94] sm:$0xf]
  %v444 = vld [vmem:[%s8 + $0x98] sm:$0xf]
  %v445 = vld [vmem:[%s8 + $0x9c] sm:$0xf]
  %v446 = vld [vmem:[%s8 + $0xa0] sm:$0xf]
  %v447 = vld [vmem:[%s8 + $0xa4] sm:$0xf]
  %v448 = vld [vmem:[%s8 + $0xa8] sm:$0xf]
  %v449 = vld [vmem:[%s8 + $0xac] sm:$0xf]
  %v450 = vld [vmem:[%s8 + $0xb0] sm:$0xf]
  %v451 = vld [vmem:[%s8 + $0xb4] sm:$0xf]
  %v452 = vld [vmem:[%s8 + $0xb8] sm:$0xf]
  %v453 = vld [vmem:[%s8 + $0xbc] sm:$0xf]
  %v470 = vunpack.c.l.b16 %v438
  %v471 = vunpack.c.l.b16 %v439
  %v472 = vunpack.c.l.b16 %v440
  %v473 = vunpack.c.l.b16 %v441
  %v474 = vunpack.c.l.b16 %v442
  %v475 = vunpack.c.l.b16 %v443
  %v476 = vunpack.c.l.b16 %v444
  %v477 = vunpack.c.l.b16 %v445
  %v478 = vunpack.c.l.b16 %v446
  %v479 = vunpack.c.l.b16 %v447
  %v480 = vunpack.c.l.b16 %v448
  %v481 = vunpack.c.l.b16 %v449
  %v482 = vunpack.c.l.b16 %v450
  %v483 = vunpack.c.l.b16 %v451
  %v484 = vunpack.c.l.b16 %v452
  %v485 = vunpack.c.l.b16 %v453
  %v486 = vpack.c.b16 %v471, %v470
  %v487 = vpack.c.b16 %v473, %v472
  %v488 = vpack.c.b16 %v475, %v474
  %v489 = vpack.c.b16 %v477, %v476
  %v490 = vpack.c.b16 %v479, %v478
  %v491 = vpack.c.b16 %v481, %v480
  %v492 = vpack.c.b16 %v483, %v482
  %v493 = vpack.c.b16 %v485, %v484
  %502 = vmatprep.subr.bf16.mxu0 0
  %503 = vmatpush1.bf16.msra.mxu0 %v486
  %504 = vmatprep.subr.bf16.mxu0 0
  %505 = vmatpush1.bf16.msra.mxu0 %v487
  %506 = vmatprep.subr.bf16.mxu0 0
  %507 = vmatpush1.bf16.msra.mxu0 %v488
  %508 = vmatprep.subr.bf16.mxu0 0
  %509 = vmatpush1.bf16.msra.mxu0 %v489
  %510 = vmatprep.subr.bf16.mxu0 0
  %511 = vmatpush1.bf16.msra.mxu0 %v490
  %512 = vmatprep.subr.bf16.mxu0 0
  %513 = vmatpush1.bf16.msra.mxu0 %v491
  %514 = vmatprep.subr.bf16.mxu0 0
  %515 = vmatpush1.bf16.msra.mxu0 %v492
  %516 = vmatprep.subr.bf16.mxu0 0
  %517 = vmatpush1.bf16.msra.mxu0 %v493
  %518 = vmatprep.subr.bf16.mxu0 0
  %519 = vmatpush1.bf16.msra.mxu0 0
  %520 = vmatprep.subr.bf16.mxu0 0
  %521 = vmatpush1.bf16.msra.mxu0 0
  %522 = vmatprep.subr.bf16.mxu0 0
  %523 = vmatpush1.bf16.msra.mxu0 0
  %524 = vmatprep.subr.bf16.mxu0 0
  %525 = vmatpush1.bf16.msra.mxu0 0
  %526 = vmatprep.subr.bf16.mxu0 0
  %527 = vmatpush1.bf16.msra.mxu0 0
  %528 = vmatprep.subr.bf16.mxu0 0
  %529 = vmatpush1.bf16.msra.mxu0 0
  %530 = vmatprep.subr.bf16.mxu0 0
  %531 = vmatpush1.bf16.msra.mxu0 0
  %532 = vmatprep.subr.bf16.mxu0 0
  %533 = vmatpush1.bf16.msra.mxu0 0
  %534 = vmatprep.mubr.bf16.mxu0 0
  %535 = vmatmul.mubr.bf16.gmra.mrb[0].mxu0 %v227
  %v536 = vpop.f32.mrb[0].mxu0
  %v537 = vadd.f32 0.0, %v536
  %v538 = vpop.f32.mrb[0].mxu0
  %v539 = vpop.f32.mrb[0].mxu0
  %v540 = vadd.f32 0.0, %v539
  %v541 = vpop.f32.mrb[0].mxu0
  %542 = vdwg.mxu0
  %v543 = vadd.f32 %v432, %v537
  %v544 = vadd.f32 %v435, %v540
  %v545 = vld [vmem:[%s9] sm:$0x1]
  %v547 = vlaneseq
  %v548 = vshrl.u32 %v547, 7
  %v549 = vsub.s32 0, %v548
  %v550 = vrot.slane %v545, %v549
  %v552 = vadd.f32 %v543, %v550
  %v553 = vadd.f32 %v544, %v550
  %v554 = vmax.f32 %v552, 0.0
  %v555 = vmax.f32 %v553, 0.0
  %v556 = vld [vmem:[%s10] sm:$0xff]
  %v557 = vmul.f32 %v554, %v556
  %v558 = vmul.f32 %v555, %v556
  %v559 = vrot.slane %v557, 4
  %v560 = vadd.f32 %v557, %v559
  %v561 = vrot.slane %v560, 2
  %v562 = vadd.f32 %v560, %v561
  %v563 = vrot.slane %v562, 1
  %v564 = vadd.f32 %v562, %v563
  %v565 = vrot.slane %v558, 4
  %v566 = vadd.f32 %v558, %v565
  %v567 = vrot.slane %v566, 2
  %v568 = vadd.f32 %v566, %v567
  %v569 = vrot.slane %v568, 1
  %v570 = vadd.f32 %v568, %v569
  %vm573 = vcmask 1041409
  %v574 = vsel %vm573, %v570, %v564
  %vm576 = vcmask 1041408
  %v577 = vsel %vm576, %v574, 0.0
  %578 = vadd.xlane.f32.xlu0 %v577
  %v579 = vpop.xlane.xlu0 %578
  %v580 = vld [vmem:[#allocation2] sm:$0x1]
  %v582 = vlaneseq
  %v583 = vshrl.u32 %v582, 7
  %v584 = vsub.s32 0, %v583
  %v585 = vrot.slane %v580, %v584
  %v587 = vadd.f32 %v579, %v585
  %vm588 = vcmask 1024
  %589 = vst.msk [vmem:[%s18] sm:$0x3] %vm588, %v587
  %v590 = vld [vmem:[%s12] sm:$0xf]
  %v591 = vld [vmem:[%s12 + $0x4] sm:$0xf]
  %v592 = vld [vmem:[%s12 + $0x8] sm:$0xf]
  %v593 = vld [vmem:[%s12 + $0xc] sm:$0xf]
  %v594 = vld [vmem:[%s12 + $0x10] sm:$0xf]
  %v595 = vld [vmem:[%s12 + $0x14] sm:$0xf]
  %v596 = vld [vmem:[%s13] sm:$0x1]
  %v597 = vld [vmem:[%s2] sm:$0xf]
  %v598 = vld [vmem:[%s2 + $0x4] sm:$0xf]
  %v599 = vld [vmem:[%s2 + $0x8] sm:$0xf]
  %v600 = vld [vmem:[%s2 + $0xc] sm:$0xf]
  %v602 = vlaneseq
  %v603 = vshrl.u32 %v602, 7
  %v604 = vsub.s32 0, %v603
  %v605 = vrot.slane %v596, %v604
  %v611 = vunpack.c.l.b16 %v597
  %v612 = vunpack.c.l.b16 %v598
  %v613 = vunpack.c.l.b16 %v599
  %v614 = vunpack.c.l.b16 %v600
  %v615 = vpack.c.b16 %v612, %v611
  %v616 = vpack.c.b16 %v614, %v613
  %v623 = vunpack.c.l.b16 %v590
  %v624 = vunpack.c.l.b16 %v591
  %v625 = vunpack.c.l.b16 %v592
  %v626 = vunpack.c.l.b16 %v593
  %v627 = vunpack.c.l.b16 %v594
  %v628 = vunpack.c.l.b16 %v595
  %v629 = vpack.c.b16 %v624, %v623
  %v630 = vpack.c.b16 %v626, %v625
  %v631 = vpack.c.b16 %v628, %v627
  %v636 = vsel %vm104, %v615, 0
  %v639 = vsel %vm104, %v616, 0
  %641 = vmatprep.subr.bf16.mxu0 0
  %642 = vmatpush1.bf16.msra.mxu0 %v629
  %643 = vmatprep.subr.bf16.mxu0 0
  %644 = vmatpush1.bf16.msra.mxu0 %v630
  %645 = vmatprep.subr.bf16.mxu0 0
  %646 = vmatpush1.bf16.msra.mxu0 %v631
  %647 = vmatprep.subr.bf16.mxu0 0
  %648 = vmatpush1.bf16.msra.mxu0 0
  %649 = vmatprep.subr.bf16.mxu0 0
  %650 = vmatpush1.bf16.msra.mxu0 0
  %651 = vmatprep.subr.bf16.mxu0 0
  %652 = vmatpush1.bf16.msra.mxu0 0
  %653 = vmatprep.subr.bf16.mxu0 0
  %654 = vmatpush1.bf16.msra.mxu0 0
  %655 = vmatprep.subr.bf16.mxu0 0
  %656 = vmatpush1.bf16.msra.mxu0 0
  %657 = vmatprep.subr.bf16.mxu0 0
  %658 = vmatpush1.bf16.msra.mxu0 0
  %659 = vmatprep.subr.bf16.mxu0 0
  %660 = vmatpush1.bf16.msra.mxu0 0
  %661 = vmatprep.subr.bf16.mxu0 0
  %662 = vmatpush1.bf16.msra.mxu0 0
  %663 = vmatprep.subr.bf16.mxu0 0
  %664 = vmatpush1.bf16.msra.mxu0 0
  %665 = vmatprep.subr.bf16.mxu0 0
  %666 = vmatpush1.bf16.msra.mxu0 0
  %667 = vmatprep.subr.bf16.mxu0 0
  %668 = vmatpush1.bf16.msra.mxu0 0
  %669 = vmatprep.subr.bf16.mxu0 0
  %670 = vmatpush1.bf16.msra.mxu0 0
  %671 = vmatprep.subr.bf16.mxu0 0
  %672 = vmatpush1.bf16.msra.mxu0 0
  %673 = vmatprep.mubr.bf16.mxu0 0
  %674 = vmatmul.mubr.bf16.gmra.mrb[0].mxu0 %v636
  %v675 = vpop.f32.mrb[0].mxu0
  %v676 = vadd.f32 %v605, %v675
  %v677 = vpop.f32.mrb[0].mxu0
  %v678 = vpop.f32.mrb[0].mxu0
  %v679 = vadd.f32 %v605, %v678
  %v680 = vpop.f32.mrb[0].mxu0
  %681 = vmatprep.mubr.bf16.mxu0 0
  %682 = vmatmul.mubr.bf16.gmra.mrb[0].mxu0 %v639
  %v683 = vpop.f32.mrb[0].mxu0
  %v684 = vadd.f32 %v605, %v683
  %v685 = vpop.f32.mrb[0].mxu0
  %v686 = vpop.f32.mrb[0].mxu0
  %v687 = vadd.f32 %v605, %v686
  %v688 = vpop.f32.mrb[0].mxu0
  %689 = vdwg.mxu0
  %v690 = vmax.f32 %v676, 0.0
  %v691 = vmax.f32 %v679, 0.0
  %v692 = vmax.f32 %v684, 0.0
  %v693 = vmax.f32 %v687, 0.0
  %v694 = vld [vmem:[%s3] sm:$0xf]
  %v695 = vld [vmem:[%s3 + $0x4] sm:$0xf]
  %v696 = vld [vmem:[%s3 + $0x8] sm:$0xf]
  %v697 = vld [vmem:[%s3 + $0xc] sm:$0xf]
  %v702 = vunpack.c.l.b16 %v694
  %v703 = vunpack.c.l.b16 %v695
  %v704 = vunpack.c.l.b16 %v696
  %v705 = vunpack.c.l.b16 %v697
  %v706 = vpack.c.b16 %v703, %v702
  %v707 = vpack.c.b16 %v705, %v704
  %v709 = vsel %vm104, %v706, 0
  %v712 = vsel %vm104, %v707, 0
  %714 = vmatprep.subr.bf16.mxu0 0
  %715 = vmatpush1.bf16.msra.mxu0 %v629
  %716 = vmatprep.subr.bf16.mxu0 0
  %717 = vmatpush1.bf16.msra.mxu0 %v630
  %718 = vmatprep.subr.bf16.mxu0 0
  %719 = vmatpush1.bf16.msra.mxu0 %v631
  %720 = vmatprep.subr.bf16.mxu0 0
  %721 = vmatpush1.bf16.msra.mxu0 0
  %722 = vmatprep.subr.bf16.mxu0 0
  %723 = vmatpush1.bf16.msra.mxu0 0
  %724 = vmatprep.subr.bf16.mxu0 0
  %725 = vmatpush1.bf16.msra.mxu0 0
  %726 = vmatprep.subr.bf16.mxu0 0
  %727 = vmatpush1.bf16.msra.mxu0 0
  %728 = vmatprep.subr.bf16.mxu0 0
  %729 = vmatpush1.bf16.msra.mxu0 0
  %730 = vmatprep.subr.bf16.mxu0 0
  %731 = vmatpush1.bf16.msra.mxu0 0
  %732 = vmatprep.subr.bf16.mxu0 0
  %733 = vmatpush1.bf16.msra.mxu0 0
  %734 = vmatprep.subr.bf16.mxu0 0
  %735 = vmatpush1.bf16.msra.mxu0 0
  %736 = vmatprep.subr.bf16.mxu0 0
  %737 = vmatpush1.bf16.msra.mxu0 0
  %738 = vmatprep.subr.bf16.mxu0 0
  %739 = vmatpush1.bf16.msra.mxu0 0
  %740 = vmatprep.subr.bf16.mxu0 0
  %741 = vmatpush1.bf16.msra.mxu0 0
  %742 = vmatprep.subr.bf16.mxu0 0
  %743 = vmatpush1.bf16.msra.mxu0 0
  %744 = vmatprep.subr.bf16.mxu0 0
  %745 = vmatpush1.bf16.msra.mxu0 0
  %746 = vmatprep.mubr.bf16.mxu0 0
  %747 = vmatmul.mubr.bf16.gmra.mrb[0].mxu0 %v709
  %v748 = vpop.f32.mrb[0].mxu0
  %v749 = vadd.f32 %v605, %v748
  %v750 = vpop.f32.mrb[0].mxu0
  %v751 = vpop.f32.mrb[0].mxu0
  %v752 = vadd.f32 %v605, %v751
  %v753 = vpop.f32.mrb[0].mxu0
  %754 = vmatprep.mubr.bf16.mxu0 0
  %755 = vmatmul.mubr.bf16.gmra.mrb[0].mxu0 %v712
  %v756 = vpop.f32.mrb[0].mxu0
  %v757 = vadd.f32 %v605, %v756
  %v758 = vpop.f32.mrb[0].mxu0
  %v759 = vpop.f32.mrb[0].mxu0
  %v760 = vadd.f32 %v605, %v759
  %v761 = vpop.f32.mrb[0].mxu0
  %762 = vdwg.mxu0
  %v763 = vmax.f32 %v749, 0.0
  %v764 = vmax.f32 %v752, 0.0
  %v765 = vmax.f32 %v757, 0.0
  %v766 = vmax.f32 %v760, 0.0
  %v767 = vrot.slane %v763, 7
  %v768 = vrot.slane %v764, 7
  %v769 = vrot.slane %v765, 7
  %v770 = vrot.slane %v766, 7
  %v771 = vsel %vm208, %v769, %v770
  %v772 = vsel %vm208, %v768, %v769
  %v773 = vsel %vm208, %v767, %v768
  %v774 = vsel %vm208, %v770, %v767
  %v775 = vld [vmem:[%s5] sm:$0xff]
  %v776 = vld [vmem:[%s5 + $0x8] sm:$0xff]
  %v777 = vld [vmem:[%s5 + $0x10] sm:$0xff]
  %v778 = vld [vmem:[%s5 + $0x18] sm:$0xff]
  %780 = vset.pattern.permute.xlu0 0
  %781 = vperm.xlu0 %780, %v775
  %v782 = vpop.permute.xlu0 %781
  %785 = vset.pattern.permute.xlu0 0
  %786 = vperm.xlu0 %785, %v776
  %v787 = vpop.permute.xlu0 %786
  %790 = vset.pattern.permute.xlu0 0
  %791 = vperm.xlu0 %790, %v777
  %v792 = vpop.permute.xlu0 %791
  %795 = vset.pattern.permute.xlu0 0
  %796 = vperm.xlu0 %795, %v778
  %v797 = vpop.permute.xlu0 %796
  %v799 = vmul.f32 %v774, %v782
  %v800 = vmul.f32 %v773, %v787
  %v801 = vmul.f32 %v772, %v792
  %v802 = vmul.f32 %v771, %v797
  %v803 = vpack.c.bf16 %v800, %v799
  %v804 = vpack.c.bf16 %v802, %v801
  %v805 = vpack.c.bf16 %v691, %v690
  %v806 = vpack.c.bf16 %v693, %v692
  %v807 = vpack.c.bf16 %v764, %v763
  %v808 = vpack.c.bf16 %v766, %v765
  %v809 = vld [vmem:[%s14] sm:$0xf]
  %v810 = vld [vmem:[%s14 + $0x4] sm:$0xf]
  %v811 = vld [vmem:[%s14 + $0x8] sm:$0xf]
  %v812 = vld [vmem:[%s14 + $0xc] sm:$0xf]
  %v813 = vld [vmem:[%s14 + $0x10] sm:$0xf]
  %v814 = vld [vmem:[%s14 + $0x14] sm:$0xf]
  %v815 = vld [vmem:[%s14 + $0x18] sm:$0xf]
  %v816 = vld [vmem:[%s14 + $0x1c] sm:$0xf]
  %v817 = vld [vmem:[%s14 + $0x20] sm:$0xf]
  %v818 = vld [vmem:[%s14 + $0x24] sm:$0xf]
  %v819 = vld [vmem:[%s14 + $0x28] sm:$0xf]
  %v820 = vld [vmem:[%s14 + $0x2c] sm:$0xf]
  %v821 = vld [vmem:[%s14 + $0x30] sm:$0xf]
  %v822 = vld [vmem:[%s14 + $0x34] sm:$0xf]
  %v823 = vld [vmem:[%s14 + $0x38] sm:$0xf]
  %v824 = vld [vmem:[%s14 + $0x3c] sm:$0xf]
  %v825 = vld [vmem:[%s14 + $0x40] sm:$0xf]
  %v826 = vld [vmem:[%s14 + $0x44] sm:$0xf]
  %v827 = vld [vmem:[%s14 + $0x48] sm:$0xf]
  %v828 = vld [vmem:[%s14 + $0x4c] sm:$0xf]
  %v829 = vld [vmem:[%s14 + $0x50] sm:$0xf]
  %v830 = vld [vmem:[%s14 + $0x54] sm:$0xf]
  %v831 = vld [vmem:[%s14 + $0x58] sm:$0xf]
  %v832 = vld [vmem:[%s14 + $0x5c] sm:$0xf]
  %v833 = vld [vmem:[%s14 + $0x60] sm:$0xf]
  %v834 = vld [vmem:[%s14 + $0x64] sm:$0xf]
  %v835 = vld [vmem:[%s14 + $0x68] sm:$0xf]
  %v836 = vld [vmem:[%s14 + $0x6c] sm:$0xf]
  %v837 = vld [vmem:[%s14 + $0x70] sm:$0xf]
  %v838 = vld [vmem:[%s14 + $0x74] sm:$0xf]
  %v839 = vld [vmem:[%s14 + $0x78] sm:$0xf]
  %v840 = vld [vmem:[%s14 + $0x7c] sm:$0xf]
  %v857 = vunpack.c.l.b16 %v825
  %v858 = vunpack.c.l.b16 %v826
  %v859 = vunpack.c.l.b16 %v827
  %v860 = vunpack.c.l.b16 %v828
  %v861 = vunpack.c.l.b16 %v829
  %v862 = vunpack.c.l.b16 %v830
  %v863 = vunpack.c.l.b16 %v831
  %v864 = vunpack.c.l.b16 %v832
  %v865 = vunpack.c.l.b16 %v833
  %v866 = vunpack.c.l.b16 %v834
  %v867 = vunpack.c.l.b16 %v835
  %v868 = vunpack.c.l.b16 %v836
  %v869 = vunpack.c.l.b16 %v837
  %v870 = vunpack.c.l.b16 %v838
  %v871 = vunpack.c.l.b16 %v839
  %v872 = vunpack.c.l.b16 %v840
  %v873 = vpack.c.b16 %v858, %v857
  %v874 = vpack.c.b16 %v860, %v859
  %v875 = vpack.c.b16 %v862, %v861
  %v876 = vpack.c.b16 %v864, %v863
  %v877 = vpack.c.b16 %v866, %v865
  %v878 = vpack.c.b16 %v868, %v867
  %v879 = vpack.c.b16 %v870, %v869
  %v880 = vpack.c.b16 %v872, %v871
  %889 = vmatprep.subr.bf16.mxu0 0
  %890 = vmatpush1.bf16.msra.mxu0 %v873
  %891 = vmatprep.subr.bf16.mxu0 0
  %892 = vmatpush1.bf16.msra.mxu0 %v874
  %893 = vmatprep.subr.bf16.mxu0 0
  %894 = vmatpush1.bf16.msra.mxu0 %v875
  %895 = vmatprep.subr.bf16.mxu0 0
  %896 = vmatpush1.bf16.msra.mxu0 %v876
  %897 = vmatprep.subr.bf16.mxu0 0
  %898 = vmatpush1.bf16.msra.mxu0 %v877
  %899 = vmatprep.subr.bf16.mxu0 0
  %900 = vmatpush1.bf16.msra.mxu0 %v878
  %901 = vmatprep.subr.bf16.mxu0 0
  %902 = vmatpush1.bf16.msra.mxu0 %v879
  %903 = vmatprep.subr.bf16.mxu0 0
  %904 = vmatpush1.bf16.msra.mxu0 %v880
  %905 = vmatprep.subr.bf16.mxu0 0
  %906 = vmatpush1.bf16.msra.mxu0 0
  %907 = vmatprep.subr.bf16.mxu0 0
  %908 = vmatpush1.bf16.msra.mxu0 0
  %909 = vmatprep.subr.bf16.mxu0 0
  %910 = vmatpush1.bf16.msra.mxu0 0
  %911 = vmatprep.subr.bf16.mxu0 0
  %912 = vmatpush1.bf16.msra.mxu0 0
  %913 = vmatprep.subr.bf16.mxu0 0
  %914 = vmatpush1.bf16.msra.mxu0 0
  %915 = vmatprep.subr.bf16.mxu0 0
  %916 = vmatpush1.bf16.msra.mxu0 0
  %917 = vmatprep.subr.bf16.mxu0 0
  %918 = vmatpush1.bf16.msra.mxu0 0
  %919 = vmatprep.subr.bf16.mxu0 0
  %920 = vmatpush1.bf16.msra.mxu0 0
  %921 = vmatprep.mubr.bf16.mxu0 0
  %922 = vmatmul.mubr.bf16.gmra.mrb[0].mxu0 %v805
  %v923 = vpop.f32.mrb[0].mxu0
  %v924 = vadd.f32 0.0, %v923
  %v925 = vpop.f32.mrb[0].mxu0
  %v926 = vpop.f32.mrb[0].mxu0
  %v927 = vadd.f32 0.0, %v926
  %v928 = vpop.f32.mrb[0].mxu0
  %929 = vmatprep.mubr.bf16.mxu0 0
  %930 = vmatmul.mubr.bf16.gmra.mrb[0].mxu0 %v806
  %v931 = vpop.f32.mrb[0].mxu0
  %v932 = vadd.f32 0.0, %v931
  %v933 = vpop.f32.mrb[0].mxu0
  %v934 = vpop.f32.mrb[0].mxu0
  %v935 = vadd.f32 0.0, %v934
  %v936 = vpop.f32.mrb[0].mxu0
  %937 = vdwg.mxu0
  %v954 = vunpack.c.l.b16 %v809
  %v955 = vunpack.c.l.b16 %v810
  %v956 = vunpack.c.l.b16 %v811
  %v957 = vunpack.c.l.b16 %v812
  %v958 = vunpack.c.l.b16 %v813
  %v959 = vunpack.c.l.b16 %v814
  %v960 = vunpack.c.l.b16 %v815
  %v961 = vunpack.c.l.b16 %v816
  %v962 = vunpack.c.l.b16 %v817
  %v963 = vunpack.c.l.b16 %v818
  %v964 = vunpack.c.l.b16 %v819
  %v965 = vunpack.c.l.b16 %v820
  %v966 = vunpack.c.l.b16 %v821
  %v967 = vunpack.c.l.b16 %v822
  %v968 = vunpack.c.l.b16 %v823
  %v969 = vunpack.c.l.b16 %v824
  %v970 = vpack.c.b16 %v955, %v954
  %v971 = vpack.c.b16 %v957, %v956
  %v972 = vpack.c.b16 %v959, %v958
  %v973 = vpack.c.b16 %v961, %v960
  %v974 = vpack.c.b16 %v963, %v962
  %v975 = vpack.c.b16 %v965, %v964
  %v976 = vpack.c.b16 %v967, %v966
  %v977 = vpack.c.b16 %v969, %v968
  %986 = vmatprep.subr.bf16.mxu0 0
  %987 = vmatpush1.bf16.msra.mxu0 %v970
  %988 = vmatprep.subr.bf16.mxu0 0
  %989 = vmatpush1.bf16.msra.mxu0 %v971
  %990 = vmatprep.subr.bf16.mxu0 0
  %991 = vmatpush1.bf16.msra.mxu0 %v972
  %992 = vmatprep.subr.bf16.mxu0 0
  %993 = vmatpush1.bf16.msra.mxu0 %v973
  %994 = vmatprep.subr.bf16.mxu0 0
  %995 = vmatpush1.bf16.msra.mxu0 %v974
  %996 = vmatprep.subr.bf16.mxu0 0
  %997 = vmatpush1.bf16.msra.mxu0 %v975
  %998 = vmatprep.subr.bf16.mxu0 0
  %999 = vmatpush1.bf16.msra.mxu0 %v976
  %1000 = vmatprep.subr.bf16.mxu0 0
  %1001 = vmatpush1.bf16.msra.mxu0 %v977
  %1002 = vmatprep.subr.bf16.mxu0 0
  %1003 = vmatpush1.bf16.msra.mxu0 0
  %1004 = vmatprep.subr.bf16.mxu0 0
  %1005 = vmatpush1.bf16.msra.mxu0 0
  %1006 = vmatprep.subr.bf16.mxu0 0
  %1007 = vmatpush1.bf16.msra.mxu0 0
  %1008 = vmatprep.subr.bf16.mxu0 0
  %1009 = vmatpush1.bf16.msra.mxu0 0
  %1010 = vmatprep.subr.bf16.mxu0 0
  %1011 = vmatpush1.bf16.msra.mxu0 0
  %1012 = vmatprep.subr.bf16.mxu0 0
  %1013 = vmatpush1.bf16.msra.mxu0 0
  %1014 = vmatprep.subr.bf16.mxu0 0
  %1015 = vmatpush1.bf16.msra.mxu0 0
  %1016 = vmatprep.subr.bf16.mxu0 0
  %1017 = vmatpush1.bf16.msra.mxu0 0
  %1018 = vmatprep.mubr.bf16.mxu0 0
  %1019 = vmatmul.mubr.bf16.gmra.mrb[0].mxu0 %v803
  %v1020 = vpop.f32.mrb[0].mxu0
  %v1021 = vadd.f32 %v924, %v1020
  %v1022 = vpop.f32.mrb[0].mxu0
  %v1023 = vpop.f32.mrb[0].mxu0
  %v1024 = vadd.f32 %v927, %v1023
  %v1025 = vpop.f32.mrb[0].mxu0
  %1026 = vmatprep.mubr.bf16.mxu0 0
  %1027 = vmatmul.mubr.bf16.gmra.mrb[0].mxu0 %v804
  %v1028 = vpop.f32.mrb[0].mxu0
  %v1029 = vadd.f32 %v932, %v1028
  %v1030 = vpop.f32.mrb[0].mxu0
  %v1031 = vpop.f32.mrb[0].mxu0
  %v1032 = vadd.f32 %v935, %v1031
  %v1033 = vpop.f32.mrb[0].mxu0
  %1034 = vdwg.mxu0
  %v1035 = vld [vmem:[%s14 + $0x80] sm:$0xf]
  %v1036 = vld [vmem:[%s14 + $0x84] sm:$0xf]
  %v1037 = vld [vmem:[%s14 + $0x88] sm:$0xf]
  %v1038 = vld [vmem:[%s14 + $0x8c] sm:$0xf]
  %v1039 = vld [vmem:[%s14 + $0x90] sm:$0xf]
  %v1040 = vld [vmem:[%s14 + $0x94] sm:$0xf]
  %v1041 = vld [vmem:[%s14 + $0x98] sm:$0xf]
  %v1042 = vld [vmem:[%s14 + $0x9c] sm:$0xf]
  %v1043 = vld [vmem:[%s14 + $0xa0] sm:$0xf]
  %v1044 = vld [vmem:[%s14 + $0xa4] sm:$0xf]
  %v1045 = vld [vmem:[%s14 + $0xa8] sm:$0xf]
  %v1046 = vld [vmem:[%s14 + $0xac] sm:$0xf]
  %v1047 = vld [vmem:[%s14 + $0xb0] sm:$0xf]
  %v1048 = vld [vmem:[%s14 + $0xb4] sm:$0xf]
  %v1049 = vld [vmem:[%s14 + $0xb8] sm:$0xf]
  %v1050 = vld [vmem:[%s14 + $0xbc] sm:$0xf]
  %v1067 = vunpack.c.l.b16 %v1035
  %v1068 = vunpack.c.l.b16 %v1036
  %v1069 = vunpack.c.l.b16 %v1037
  %v1070 = vunpack.c.l.b16 %v1038
  %v1071 = vunpack.c.l.b16 %v1039
  %v1072 = vunpack.c.l.b16 %v1040
  %v1073 = vunpack.c.l.b16 %v1041
  %v1074 = vunpack.c.l.b16 %v1042
  %v1075 = vunpack.c.l.b16 %v1043
  %v1076 = vunpack.c.l.b16 %v1044
  %v1077 = vunpack.c.l.b16 %v1045
  %v1078 = vunpack.c.l.b16 %v1046
  %v1079 = vunpack.c.l.b16 %v1047
  %v1080 = vunpack.c.l.b16 %v1048
  %v1081 = vunpack.c.l.b16 %v1049
  %v1082 = vunpack.c.l.b16 %v1050
  %v1083 = vpack.c.b16 %v1068, %v1067
  %v1084 = vpack.c.b16 %v1070, %v1069
  %v1085 = vpack.c.b16 %v1072, %v1071
  %v1086 = vpack.c.b16 %v1074, %v1073
  %v1087 = vpack.c.b16 %v1076, %v1075
  %v1088 = vpack.c.b16 %v1078, %v1077
  %v1089 = vpack.c.b16 %v1080, %v1079
  %v1090 = vpack.c.b16 %v1082, %v1081
  %1099 = vmatprep.subr.bf16.mxu0 0
  %1100 = vmatpush1.bf16.msra.mxu0 %v1083
  %1101 = vmatprep.subr.bf16.mxu0 0
  %1102 = vmatpush1.bf16.msra.mxu0 %v1084
  %1103 = vmatprep.subr.bf16.mxu0 0
  %1104 = vmatpush1.bf16.msra.mxu0 %v1085
  %1105 = vmatprep.subr.bf16.mxu0 0
  %1106 = vmatpush1.bf16.msra.mxu0 %v1086
  %1107 = vmatprep.subr.bf16.mxu0 0
  %1108 = vmatpush1.bf16.msra.mxu0 %v1087
  %1109 = vmatprep.subr.bf16.mxu0 0
  %1110 = vmatpush1.bf16.msra.mxu0 %v1088
  %1111 = vmatprep.subr.bf16.mxu0 0
  %1112 = vmatpush1.bf16.msra.mxu0 %v1089
  %1113 = vmatprep.subr.bf16.mxu0 0
  %1114 = vmatpush1.bf16.msra.mxu0 %v1090
  %1115 = vmatprep.subr.bf16.mxu0 0
  %1116 = vmatpush1.bf16.msra.mxu0 0
  %1117 = vmatprep.subr.bf16.mxu0 0
  %1118 = vmatpush1.bf16.msra.mxu0 0
  %1119 = vmatprep.subr.bf16.mxu0 0
  %1120 = vmatpush1.bf16.msra.mxu0 0
  %1121 = vmatprep.subr.bf16.mxu0 0
  %1122 = vmatpush1.bf16.msra.mxu0 0
  %1123 = vmatprep.subr.bf16.mxu0 0
  %1124 = vmatpush1.bf16.msra.mxu0 0
  %1125 = vmatprep.subr.bf16.mxu0 0
  %1126 = vmatpush1.bf16.msra.mxu0 0
  %1127 = vmatprep.subr.bf16.mxu0 0
  %1128 = vmatpush1.bf16.msra.mxu0 0
  %1129 = vmatprep.subr.bf16.mxu0 0
  %1130 = vmatpush1.bf16.msra.mxu0 0
  %1131 = vmatprep.mubr.bf16.mxu0 0
  %1132 = vmatmul.mubr.bf16.gmra.mrb[0].mxu0 %v807
  %v1133 = vpop.f32.mrb[0].mxu0
  %v1134 = vadd.f32 0.0, %v1133
  %v1135 = vpop.f32.mrb[0].mxu0
  %v1136 = vpop.f32.mrb[0].mxu0
  %v1137 = vadd.f32 0.0, %v1136
  %v1138 = vpop.f32.mrb[0].mxu0
  %1139 = vmatprep.mubr.bf16.mxu0 0
  %1140 = vmatmul.mubr.bf16.gmra.mrb[0].mxu0 %v808
  %v1141 = vpop.f32.mrb[0].mxu0
  %v1142 = vadd.f32 0.0, %v1141
  %v1143 = vpop.f32.mrb[0].mxu0
  %v1144 = vpop.f32.mrb[0].mxu0
  %v1145 = vadd.f32 0.0, %v1144
  %v1146 = vpop.f32.mrb[0].mxu0
  %1147 = vdwg.mxu0
  %v1148 = vadd.f32 %v1021, %v1134
  %v1149 = vadd.f32 %v1024, %v1137
  %v1150 = vadd.f32 %v1029, %v1142
  %v1151 = vadd.f32 %v1032, %v1145
  %v1152 = vld [vmem:[%s15] sm:$0x1]
  %v1154 = vlaneseq
  %v1155 = vshrl.u32 %v1154, 7
  %v1156 = vsub.s32 0, %v1155
  %v1157 = vrot.slane %v1152, %v1156
  %v1159 = vadd.f32 %v1148, %v1157
  %v1160 = vadd.f32 %v1149, %v1157
  %v1161 = vadd.f32 %v1150, %v1157
  %v1162 = vadd.f32 %v1151, %v1157
  %v1163 = vmax.f32 %v1159, 0.0
  %v1164 = vmax.f32 %v1160, 0.0
  %v1165 = vmax.f32 %v1161, 0.0
  %v1166 = vmax.f32 %v1162, 0.0
  %v1167 = vld [vmem:[%s16] sm:$0xff]
  %v1168 = vld [vmem:[%s16 + $0x8] sm:$0xff]
  %v1169 = vmul.f32 %v1163, %v1167
  %v1170 = vmul.f32 %v1164, %v1168
  %v1171 = vmul.f32 %v1165, %v1167
  %v1172 = vmul.f32 %v1166, %v1168
  %v1173 = vadd.f32 %v1169, %v1170
  %v1174 = vrot.slane %v1173, 4
  %v1175 = vadd.f32 %v1173, %v1174
  %v1176 = vrot.slane %v1175, 2
  %v1177 = vadd.f32 %v1175, %v1176
  %v1178 = vrot.slane %v1177, 1
  %v1179 = vadd.f32 %v1177, %v1178
  %v1180 = vadd.f32 %v1171, %v1172
  %v1181 = vrot.slane %v1180, 4
  %v1182 = vadd.f32 %v1180, %v1181
  %v1183 = vrot.slane %v1182, 2
  %v1184 = vadd.f32 %v1182, %v1183
  %v1185 = vrot.slane %v1184, 1
  %v1186 = vadd.f32 %v1184, %v1185
  %v1189 = vsel %vm573, %v1186, %v1179
  %v1191 = vsel %vm576, %v1189, 0.0
  %1192 = vadd.xlane.f32.xlu0 %v1191
  %v1193 = vpop.xlane.xlu0 %1192
  %v1194 = vld [vmem:[#allocation3] sm:$0x1]
  %v1196 = vlaneseq
  %v1197 = vshrl.u32 %v1196, 7
  %v1198 = vsub.s32 0, %v1197
  %v1199 = vrot.slane %v1194, %v1198
  %v1201 = vadd.f32 %v1193, %v1199
  %1202 = vst.msk [vmem:[%s19] sm:$0x3] %vm588, %v1201
  // Predicated region
  $region74: #{start_end_regression.1} parent=0 // pred_check
    _
  $region75: #{start_end_regression.1} parent=0 // pred_check_branch
    %1204 = sbr.rel (0) target = $region77
  $region76: #{start_end_regression.1} parent=0 // pred_region
    _
  $region77: #{start_end_regression.1} parent=0 // pred_fallthru
    _
  // Predicated region
  $region78: #{start_end_regression.1} parent=0 // pred_check
    _
  $region79: #{start_end_regression.1} parent=0 // pred_check_branch
    %1206 = sbr.rel (0) target = $region81
  $region80: #{start_end_regression.1} parent=0 // pred_region
    _
  $region81: #{start_end_regression.1} parent=0 // pred_fallthru
    _
  // Predicated region
  $region82: #{start_end_regression.1} parent=0 // pred_check
    _
  $region83: #{start_end_regression.1} parent=0 // pred_check_branch
    %1208 = sbr.rel (0) target = $region85
  $region84: #{start_end_regression.1} parent=0 // pred_region
    _
  $region85: #{start_end_regression.1} parent=0 // pred_fallthru
    _
  // Predicated region
  $region86: #{start_end_regression.1} parent=0 // pred_check
    _
  $region87: #{start_end_regression.1} parent=0 // pred_check_branch
    %1210 = sbr.rel (0) target = $region89
  $region88: #{start_end_regression.1} parent=0 // pred_region
    _
  $region89: #{start_end_regression.1} parent=0 // pred_fallthru
    _

</llo_original>
